<compile_context>
chip_gen: v7x
topology: tpu7x:2x2x1
jax: 0.10.0
libtpu: 0.0.40
codegen_flags: <defaults>
</compile_context>

<pallas_src>
import jax
import jax.numpy as jnp
import numpy as np
from jax import lax
from jax.experimental import pallas as pl
from jax.experimental.pallas import tpu as pltpu

EPS = 1e-5


def _layernorm(x, gamma, beta):
    mean = jnp.mean(x, axis=-1, keepdims=True)
    var = jnp.mean((x - mean) ** 2, axis=-1, keepdims=True)
    return (x - mean) * lax.rsqrt(var + EPS) * gamma + beta


# ----------------------------------------------------------------- fused FFNN LM kernel
def ffnn_kernel(ctx_ref,                              # (B, C) int32, SMEM (scalar prefetch)
                emb_ref, ln_e_g_ref, ln_e_b_ref,      # (V, E) f32, (1, E), (1, E)
                w1_ref, b1_ref,                       # (C*E, H) bf16, (1, H) f32
                ln_h_g_ref, ln_h_b_ref,               # (1, H), (1, H)
                w2_ref, b2_ref,                       # (H, V) bf16, (1, V) f32
                out_ref,                              # (TB, V) f32
                tab_ref, xs_ref):                     # scratch: (V, E) f32, (TB, C*E) f32
    i = pl.program_id(0)
    TB = out_ref.shape[0]
    C = ctx_ref.shape[1]
    E = emb_ref.shape[1]

    # embedding LayerNorm applied to the whole (V, E) table: row-wise LN commutes with
    # the row gather, so gather(LN(table)) == LN(gather(table)) exactly.
    tab_ref[...] = _layernorm(emb_ref[...], ln_e_g_ref[...], ln_e_b_ref[...])
    # TODO(synk): nn.Dropout (dropout_emb / dropout_hidden) are eval-mode identity here.

    # Fused embedding gather, written straight into the flattened (TB, C*E) layout
    # (lane index = c*E + e, matching PyTorch's .view(B, -1) flatten order).
    for b in range(TB):
        for c in range(C):
            tok = ctx_ref[i * TB + b, c]
            xs_ref[pl.ds(b, 1), pl.ds(c * E, E)] = tab_ref[pl.ds(tok, 1), :]

    x = xs_ref[...]                                              # (TB, C*E) f32

    # fc1: one lane-full K = C*E contraction, bf16 operands, f32 accumulate.
    h = jnp.dot(x.astype(jnp.bfloat16), w1_ref[...],
                preferred_element_type=jnp.float32) + b1_ref[...]          # (TB, H)
    h = _layernorm(h, ln_h_g_ref[...], ln_h_b_ref[...])                    # fc1_norm
    h = jnp.maximum(h, 0.0)                                                # ReLU

    # fc2 with bias fused into the dot epilogue.
    logits = jnp.dot(h.astype(jnp.bfloat16), w2_ref[...],
                     preferred_element_type=jnp.float32) + b2_ref[...]     # (TB, V)

    # stable log_softmax over the vocab (f32)
    m = jnp.max(logits, axis=-1, keepdims=True)
    lse = m + jnp.log(jnp.sum(jnp.exp(logits - m), axis=-1, keepdims=True))
    out_ref[...] = logits - lse


# ------------------------------------------------------------------ pallas_call builder
def _build_call(B, C, V, E, H, TB=8):
    assert B % TB == 0, "batch must be a multiple of the 8-row sublane tile"
    CE = C * E
    vmem = pltpu.MemorySpace.VMEM

    def full(shape):
        return pl.BlockSpec(shape, lambda i, ctx: (0,) * len(shape), memory_space=vmem)

    grid_spec = pltpu.PrefetchScalarGridSpec(
        num_scalar_prefetch=1,                       # context -> SMEM
        grid=(B // TB,),
        in_specs=[
            full((V, E)),  full((1, E)), full((1, E)),      # table + embedding LN
            full((CE, H)), full((1, H)),                     # fc1
            full((1, H)),  full((1, H)),                     # fc1_norm
            full((H, V)),  full((1, V)),                     # fc2
        ],
        out_specs=pl.BlockSpec((TB, V), lambda i, ctx: (i, 0), memory_space=vmem),
        scratch_shapes=[pltpu.VMEM((V, E), jnp.float32),     # normalized table
                        pltpu.VMEM((TB, CE), jnp.float32)],  # gathered flat activations
    )
    return pl.pallas_call(
        ffnn_kernel,
        out_shape=jax.ShapeDtypeStruct((B, V), jnp.float32),
        grid_spec=grid_spec,
        compiler_params=pltpu.CompilerParams(dimension_semantics=("parallel",)),
    )


# ------------------------------------------------------------------ jitted wrapper
@jax.jit
def ffnn_lm_forward(params, context):
    B, C = context.shape
    V, E = params["emb"].shape
    H = params["fc1_b"].shape[-1]
    call = _build_call(B, C, V, E, H)
    return call(context,
                params["emb"], params["ln_emb_g"], params["ln_emb_b"],
                params["fc1_w"], params["fc1_b"],
                params["ln_h_g"], params["ln_h_b"],
                params["fc2_w"], params["fc2_b"])


# ------------------------------------------------------------------ pure-JAX reference
def reference_forward(params, context):
    def ln(x, g, b):
        m = jnp.mean(x, -1, keepdims=True)
        v = jnp.mean((x - m) ** 2, -1, keepdims=True)
        return (x - m) / jnp.sqrt(v + EPS) * g + b

    B = context.shape[0]
    emb = jnp.take(params["emb"], context, axis=0)                       # (B, C, E)
    x = ln(emb, params["ln_emb_g"][0], params["ln_emb_b"][0])
    x = x.reshape(B, -1)                                                 # (B, C*E)
    h = x @ params["fc1_w"].astype(jnp.float32) + params["fc1_b"][0]
    h = ln(h, params["ln_h_g"][0], params["ln_h_b"][0])
    h = jnp.maximum(h, 0.0)
    logits = h @ params["fc2_w"].astype(jnp.float32) + params["fc2_b"][0]
    return logits - jax.scipy.special.logsumexp(logits, axis=-1, keepdims=True)


# ------------------------------------------------------------------ main
if __name__ == "__main__":
    V, E, C, H = 128, 32, 4, 32   # vocab (lane-dense), embedding_dim, context_size, hidden_dim
    B = 16                        # multiple of the 8-row sublane tile; 2 parallel grid steps

    key = jax.random.PRNGKey(0)
    ks = jax.random.split(key, 10)

    emb_table = 0.5 * jax.random.normal(ks[0], (V, E), jnp.float32)
    emb_table = emb_table.at[0].set(0.0)                                 # padding_idx=0

    params = {
        "emb": emb_table,
        "ln_emb_g": 1.0 + 0.1 * jax.random.normal(ks[1], (1, E), jnp.float32),
        "ln_emb_b": 0.1 * jax.random.normal(ks[2], (1, E), jnp.float32),
        # fc1 weight stored pre-transposed as (C*E, H) in bf16 (MXU-native)
        "fc1_w": (0.1 * jax.random.normal(ks[3], (C * E, H), jnp.float32)).astype(jnp.bfloat16),
        "fc1_b": 0.1 * jax.random.normal(ks[4], (1, H), jnp.float32),
        "ln_h_g": 1.0 + 0.1 * jax.random.normal(ks[5], (1, H), jnp.float32),
        "ln_h_b": 0.1 * jax.random.normal(ks[6], (1, H), jnp.float32),
        # fc2 weight stored pre-transposed as (H, V) in bf16 (MXU-native)
        "fc2_w": (0.1 * jax.random.normal(ks[7], (H, V), jnp.float32)).astype(jnp.bfloat16),
        "fc2_b": 0.1 * jax.random.normal(ks[8], (1, V), jnp.float32),
    }

    context = jax.random.randint(ks[9], (B, C), 0, V, dtype=jnp.int32)

    logprobs = ffnn_lm_forward(params, context)
    jax.block_until_ready(logprobs)

    ref = reference_forward(params, context)
    # bf16 matmul operands -> relaxed tolerance (reference keeps activations in f32)
    np.testing.assert_allclose(np.asarray(logprobs), np.asarray(ref),
                               rtol=2e-2, atol=2e-2)
    # sanity: rows are valid log-prob distributions
    np.testing.assert_allclose(np.exp(np.asarray(logprobs)).sum(axis=-1),
                               np.ones(B), rtol=1e-2, atol=1e-2)

    print("KERNEL_OK")
</pallas_src>

<mosaic_0001>
module attributes {stable_mosaic.version = 11 : i64} {
  func.func @ffnn_kernel(%arg0: i32, %arg1: memref<16x4xi32, #tpu.memory_space<smem>>, %arg2: memref<128x32xf32, #tpu.memory_space<vmem>>, %arg3: memref<1x32xf32, #tpu.memory_space<vmem>>, %arg4: memref<1x32xf32, #tpu.memory_space<vmem>>, %arg5: memref<128x32xbf16, #tpu.memory_space<vmem>>, %arg6: memref<1x32xf32, #tpu.memory_space<vmem>>, %arg7: memref<1x32xf32, #tpu.memory_space<vmem>>, %arg8: memref<1x32xf32, #tpu.memory_space<vmem>>, %arg9: memref<32x128xbf16, #tpu.memory_space<vmem>>, %arg10: memref<1x128xf32, #tpu.memory_space<vmem>>, %arg11: memref<8x128xf32, #tpu.memory_space<vmem>>, %arg12: memref<128x32xf32, #tpu.memory_space<vmem>>, %arg13: memref<8x128xf32, #tpu.memory_space<vmem>>) attributes {dimension_semantics = [#tpu.dimension_semantics<parallel>], iteration_bounds = array<i64: 2>, scalar_prefetch = 1 : i64, scratch_operands = 2 : i64, tpu.core_type = #tpu.core_type<tc>, window_params = [{pipeline_mode = #tpu.pipeline_mode<synchronous>, transform_indices = @transform_0, window_bounds = array<i64: 128, 32>}, {pipeline_mode = #tpu.pipeline_mode<synchronous>, transform_indices = @transform_1, window_bounds = array<i64: 1, 32>}, {pipeline_mode = #tpu.pipeline_mode<synchronous>, transform_indices = @transform_2, window_bounds = array<i64: 1, 32>}, {pipeline_mode = #tpu.pipeline_mode<synchronous>, transform_indices = @transform_3, window_bounds = array<i64: 128, 32>}, {pipeline_mode = #tpu.pipeline_mode<synchronous>, transform_indices = @transform_4, window_bounds = array<i64: 1, 32>}, {pipeline_mode = #tpu.pipeline_mode<synchronous>, transform_indices = @transform_5, window_bounds = array<i64: 1, 32>}, {pipeline_mode = #tpu.pipeline_mode<synchronous>, transform_indices = @transform_6, window_bounds = array<i64: 1, 32>}, {pipeline_mode = #tpu.pipeline_mode<synchronous>, transform_indices = @transform_7, window_bounds = array<i64: 32, 128>}, {pipeline_mode = #tpu.pipeline_mode<synchronous>, transform_indices = @transform_8, window_bounds = array<i64: 1, 128>}, {transform_indices = @transform_9, window_bounds = array<i64: 8, 128>}]} {
    %c0 = arith.constant 0 : index
    %c0_0 = arith.constant 0 : index
    %0 = vector.load %arg2[%c0, %c0_0] : memref<128x32xf32, #tpu.memory_space<vmem>>, vector<128x32xf32>
    %c0_1 = arith.constant 0 : index
    %c0_2 = arith.constant 0 : index
    %1 = vector.load %arg3[%c0_1, %c0_2] : memref<1x32xf32, #tpu.memory_space<vmem>>, vector<1x32xf32>
    %c0_3 = arith.constant 0 : index
    %c0_4 = arith.constant 0 : index
    %2 = vector.load %arg4[%c0_3, %c0_4] : memref<1x32xf32, #tpu.memory_space<vmem>>, vector<1x32xf32>
    %cst = arith.constant dense<0.000000e+00> : vector<128xf32>
    %3 = vector.multi_reduction <add>, %0, %cst [1] : vector<128x32xf32> to vector<128xf32>
    %4 = vector.shape_cast %3 : vector<128xf32> to vector<128x1xf32>
    %cst_5 = arith.constant 3.200000e+01 : f32
    %5 = vector.broadcast %cst_5 : f32 to vector<128x1xf32>
    %6 = arith.divf %4, %5 : vector<128x1xf32>
    %7 = vector.broadcast %6 : vector<128x1xf32> to vector<128x32xf32>
    %8 = arith.subf %0, %7 : vector<128x32xf32>
    %9 = arith.mulf %8, %8 : vector<128x32xf32>
    %cst_6 = arith.constant dense<0.000000e+00> : vector<128xf32>
    %10 = vector.multi_reduction <add>, %9, %cst_6 [1] : vector<128x32xf32> to vector<128xf32>
    %11 = vector.shape_cast %10 : vector<128xf32> to vector<128x1xf32>
    %cst_7 = arith.constant 3.200000e+01 : f32
    %12 = vector.broadcast %cst_7 : f32 to vector<128x1xf32>
    %13 = arith.divf %11, %12 : vector<128x1xf32>
    %14 = vector.broadcast %6 : vector<128x1xf32> to vector<128x32xf32>
    %15 = arith.subf %0, %14 : vector<128x32xf32>
    %cst_8 = arith.constant 9.99999974E-6 : f32
    %16 = vector.broadcast %cst_8 : f32 to vector<128x1xf32>
    %17 = arith.addf %13, %16 : vector<128x1xf32>
    %18 = math.rsqrt %17 : vector<128x1xf32>
    %19 = vector.broadcast %18 : vector<128x1xf32> to vector<128x32xf32>
    %20 = arith.mulf %15, %19 : vector<128x32xf32>
    %21 = vector.broadcast %1 : vector<1x32xf32> to vector<128x32xf32>
    %22 = arith.mulf %20, %21 : vector<128x32xf32>
    %23 = vector.broadcast %2 : vector<1x32xf32> to vector<128x32xf32>
    %24 = arith.addf %22, %23 : vector<128x32xf32>
    %c0_9 = arith.constant 0 : index
    %c0_10 = arith.constant 0 : index
    %25 = vector.load %arg12[%c0_9, %c0_10] : memref<128x32xf32, #tpu.memory_space<vmem>>, vector<128x32xf32>
    tpu.vector_store %arg12[%c0_9, %c0_10], %24 {strides = array<i32>} : memref<128x32xf32, #tpu.memory_space<vmem>>, vector<128x32xf32>,
    %c8_i32 = arith.constant 8 : i32
    %26 = arith.muli %arg0, %c8_i32 : i32
    %c0_i32 = arith.constant 0 : i32
    %27 = arith.addi %26, %c0_i32 : i32
    %28 = arith.index_cast %27 : i32 to index
    %c0_11 = arith.constant 0 : index
    %29 = memref.load %arg1[%28, %c0_11] : memref<16x4xi32, #tpu.memory_space<smem>>
    %30 = arith.index_cast %29 : i32 to index
    %c0_12 = arith.constant 0 : index
    %31 = vector.load %arg12[%30, %c0_12] : memref<128x32xf32, #tpu.memory_space<vmem>>, vector<1x32xf32>
    %c0_13 = arith.constant 0 : index
    %c0_14 = arith.constant 0 : index
    %32 = vector.load %arg13[%c0_13, %c0_14] : memref<8x128xf32, #tpu.memory_space<vmem>>, vector<1x32xf32>
    tpu.vector_store %arg13[%c0_13, %c0_14], %31 {strides = array<i32>} : memref<8x128xf32, #tpu.memory_space<vmem>>, vector<1x32xf32>,
    %c8_i32_15 = arith.constant 8 : i32
    %33 = arith.muli %arg0, %c8_i32_15 : i32
    %c0_i32_16 = arith.constant 0 : i32
    %34 = arith.addi %33, %c0_i32_16 : i32
    %35 = arith.index_cast %34 : i32 to index
    %c1 = arith.constant 1 : index
    %36 = memref.load %arg1[%35, %c1] : memref<16x4xi32, #tpu.memory_space<smem>>
    %37 = arith.index_cast %36 : i32 to index
    %c0_17 = arith.constant 0 : index
    %38 = vector.load %arg12[%37, %c0_17] : memref<128x32xf32, #tpu.memory_space<vmem>>, vector<1x32xf32>
    %c0_18 = arith.constant 0 : index
    %c32 = arith.constant 32 : index
    %39 = vector.load %arg13[%c0_18, %c32] : memref<8x128xf32, #tpu.memory_space<vmem>>, vector<1x32xf32>
    tpu.vector_store %arg13[%c0_18, %c32], %38 {strides = array<i32>} : memref<8x128xf32, #tpu.memory_space<vmem>>, vector<1x32xf32>,
    %c8_i32_19 = arith.constant 8 : i32
    %40 = arith.muli %arg0, %c8_i32_19 : i32
    %c0_i32_20 = arith.constant 0 : i32
    %41 = arith.addi %40, %c0_i32_20 : i32
    %42 = arith.index_cast %41 : i32 to index
    %c2 = arith.constant 2 : index
    %43 = memref.load %arg1[%42, %c2] : memref<16x4xi32, #tpu.memory_space<smem>>
    %44 = arith.index_cast %43 : i32 to index
    %c0_21 = arith.constant 0 : index
    %45 = vector.load %arg12[%44, %c0_21] : memref<128x32xf32, #tpu.memory_space<vmem>>, vector<1x32xf32>
    %c0_22 = arith.constant 0 : index
    %c64 = arith.constant 64 : index
    %46 = vector.load %arg13[%c0_22, %c64] : memref<8x128xf32, #tpu.memory_space<vmem>>, vector<1x32xf32>
    tpu.vector_store %arg13[%c0_22, %c64], %45 {strides = array<i32>} : memref<8x128xf32, #tpu.memory_space<vmem>>, vector<1x32xf32>,
    %c8_i32_23 = arith.constant 8 : i32
    %47 = arith.muli %arg0, %c8_i32_23 : i32
    %c0_i32_24 = arith.constant 0 : i32
    %48 = arith.addi %47, %c0_i32_24 : i32
    %49 = arith.index_cast %48 : i32 to index
    %c3 = arith.constant 3 : index
    %50 = memref.load %arg1[%49, %c3] : memref<16x4xi32, #tpu.memory_space<smem>>
    %51 = arith.index_cast %50 : i32 to index
    %c0_25 = arith.constant 0 : index
    %52 = vector.load %arg12[%51, %c0_25] : memref<128x32xf32, #tpu.memory_space<vmem>>, vector<1x32xf32>
    %c0_26 = arith.constant 0 : index
    %c96 = arith.constant 96 : index
    %53 = vector.load %arg13[%c0_26, %c96] : memref<8x128xf32, #tpu.memory_space<vmem>>, vector<1x32xf32>
    tpu.vector_store %arg13[%c0_26, %c96], %52 {strides = array<i32>} : memref<8x128xf32, #tpu.memory_space<vmem>>, vector<1x32xf32>,
    %c8_i32_27 = arith.constant 8 : i32
    %54 = arith.muli %arg0, %c8_i32_27 : i32
    %c1_i32 = arith.constant 1 : i32
    %55 = arith.addi %54, %c1_i32 : i32
    %56 = arith.index_cast %55 : i32 to index
    %c0_28 = arith.constant 0 : index
    %57 = memref.load %arg1[%56, %c0_28] : memref<16x4xi32, #tpu.memory_space<smem>>
    %58 = arith.index_cast %57 : i32 to index
    %c0_29 = arith.constant 0 : index
    %59 = vector.load %arg12[%58, %c0_29] : memref<128x32xf32, #tpu.memory_space<vmem>>, vector<1x32xf32>
    %c1_30 = arith.constant 1 : index
    %c0_31 = arith.constant 0 : index
    %60 = vector.load %arg13[%c1_30, %c0_31] : memref<8x128xf32, #tpu.memory_space<vmem>>, vector<1x32xf32>
    tpu.vector_store %arg13[%c1_30, %c0_31], %59 {strides = array<i32>} : memref<8x128xf32, #tpu.memory_space<vmem>>, vector<1x32xf32>,
    %c8_i32_32 = arith.constant 8 : i32
    %61 = arith.muli %arg0, %c8_i32_32 : i32
    %c1_i32_33 = arith.constant 1 : i32
    %62 = arith.addi %61, %c1_i32_33 : i32
    %63 = arith.index_cast %62 : i32 to index
    %c1_34 = arith.constant 1 : index
    %64 = memref.load %arg1[%63, %c1_34] : memref<16x4xi32, #tpu.memory_space<smem>>
    %65 = arith.index_cast %64 : i32 to index
    %c0_35 = arith.constant 0 : index
    %66 = vector.load %arg12[%65, %c0_35] : memref<128x32xf32, #tpu.memory_space<vmem>>, vector<1x32xf32>
    %c1_36 = arith.constant 1 : index
    %c32_37 = arith.constant 32 : index
    %67 = vector.load %arg13[%c1_36, %c32_37] : memref<8x128xf32, #tpu.memory_space<vmem>>, vector<1x32xf32>
    tpu.vector_store %arg13[%c1_36, %c32_37], %66 {strides = array<i32>} : memref<8x128xf32, #tpu.memory_space<vmem>>, vector<1x32xf32>,
    %c8_i32_38 = arith.constant 8 : i32
    %68 = arith.muli %arg0, %c8_i32_38 : i32
    %c1_i32_39 = arith.constant 1 : i32
    %69 = arith.addi %68, %c1_i32_39 : i32
    %70 = arith.index_cast %69 : i32 to index
    %c2_40 = arith.constant 2 : index
    %71 = memref.load %arg1[%70, %c2_40] : memref<16x4xi32, #tpu.memory_space<smem>>
    %72 = arith.index_cast %71 : i32 to index
    %c0_41 = arith.constant 0 : index
    %73 = vector.load %arg12[%72, %c0_41] : memref<128x32xf32, #tpu.memory_space<vmem>>, vector<1x32xf32>
    %c1_42 = arith.constant 1 : index
    %c64_43 = arith.constant 64 : index
    %74 = vector.load %arg13[%c1_42, %c64_43] : memref<8x128xf32, #tpu.memory_space<vmem>>, vector<1x32xf32>
    tpu.vector_store %arg13[%c1_42, %c64_43], %73 {strides = array<i32>} : memref<8x128xf32, #tpu.memory_space<vmem>>, vector<1x32xf32>,
    %c8_i32_44 = arith.constant 8 : i32
    %75 = arith.muli %arg0, %c8_i32_44 : i32
    %c1_i32_45 = arith.constant 1 : i32
    %76 = arith.addi %75, %c1_i32_45 : i32
    %77 = arith.index_cast %76 : i32 to index
    %c3_46 = arith.constant 3 : index
    %78 = memref.load %arg1[%77, %c3_46] : memref<16x4xi32, #tpu.memory_space<smem>>
    %79 = arith.index_cast %78 : i32 to index
    %c0_47 = arith.constant 0 : index
    %80 = vector.load %arg12[%79, %c0_47] : memref<128x32xf32, #tpu.memory_space<vmem>>, vector<1x32xf32>
    %c1_48 = arith.constant 1 : index
    %c96_49 = arith.constant 96 : index
    %81 = vector.load %arg13[%c1_48, %c96_49] : memref<8x128xf32, #tpu.memory_space<vmem>>, vector<1x32xf32>
    tpu.vector_store %arg13[%c1_48, %c96_49], %80 {strides = array<i32>} : memref<8x128xf32, #tpu.memory_space<vmem>>, vector<1x32xf32>,
    %c8_i32_50 = arith.constant 8 : i32
    %82 = arith.muli %arg0, %c8_i32_50 : i32
    %c2_i32 = arith.constant 2 : i32
    %83 = arith.addi %82, %c2_i32 : i32
    %84 = arith.index_cast %83 : i32 to index
    %c0_51 = arith.constant 0 : index
    %85 = memref.load %arg1[%84, %c0_51] : memref<16x4xi32, #tpu.memory_space<smem>>
    %86 = arith.index_cast %85 : i32 to index
    %c0_52 = arith.constant 0 : index
    %87 = vector.load %arg12[%86, %c0_52] : memref<128x32xf32, #tpu.memory_space<vmem>>, vector<1x32xf32>
    %c2_53 = arith.constant 2 : index
    %c0_54 = arith.constant 0 : index
    %88 = vector.load %arg13[%c2_53, %c0_54] : memref<8x128xf32, #tpu.memory_space<vmem>>, vector<1x32xf32>
    tpu.vector_store %arg13[%c2_53, %c0_54], %87 {strides = array<i32>} : memref<8x128xf32, #tpu.memory_space<vmem>>, vector<1x32xf32>,
    %c8_i32_55 = arith.constant 8 : i32
    %89 = arith.muli %arg0, %c8_i32_55 : i32
    %c2_i32_56 = arith.constant 2 : i32
    %90 = arith.addi %89, %c2_i32_56 : i32
    %91 = arith.index_cast %90 : i32 to index
    %c1_57 = arith.constant 1 : index
    %92 = memref.load %arg1[%91, %c1_57] : memref<16x4xi32, #tpu.memory_space<smem>>
    %93 = arith.index_cast %92 : i32 to index
    %c0_58 = arith.constant 0 : index
    %94 = vector.load %arg12[%93, %c0_58] : memref<128x32xf32, #tpu.memory_space<vmem>>, vector<1x32xf32>
    %c2_59 = arith.constant 2 : index
    %c32_60 = arith.constant 32 : index
    %95 = vector.load %arg13[%c2_59, %c32_60] : memref<8x128xf32, #tpu.memory_space<vmem>>, vector<1x32xf32>
    tpu.vector_store %arg13[%c2_59, %c32_60], %94 {strides = array<i32>} : memref<8x128xf32, #tpu.memory_space<vmem>>, vector<1x32xf32>,
    %c8_i32_61 = arith.constant 8 : i32
    %96 = arith.muli %arg0, %c8_i32_61 : i32
    %c2_i32_62 = arith.constant 2 : i32
    %97 = arith.addi %96, %c2_i32_62 : i32
    %98 = arith.index_cast %97 : i32 to index
    %c2_63 = arith.constant 2 : index
    %99 = memref.load %arg1[%98, %c2_63] : memref<16x4xi32, #tpu.memory_space<smem>>
    %100 = arith.index_cast %99 : i32 to index
    %c0_64 = arith.constant 0 : index
    %101 = vector.load %arg12[%100, %c0_64] : memref<128x32xf32, #tpu.memory_space<vmem>>, vector<1x32xf32>
    %c2_65 = arith.constant 2 : index
    %c64_66 = arith.constant 64 : index
    %102 = vector.load %arg13[%c2_65, %c64_66] : memref<8x128xf32, #tpu.memory_space<vmem>>, vector<1x32xf32>
    tpu.vector_store %arg13[%c2_65, %c64_66], %101 {strides = array<i32>} : memref<8x128xf32, #tpu.memory_space<vmem>>, vector<1x32xf32>,
    %c8_i32_67 = arith.constant 8 : i32
    %103 = arith.muli %arg0, %c8_i32_67 : i32
    %c2_i32_68 = arith.constant 2 : i32
    %104 = arith.addi %103, %c2_i32_68 : i32
    %105 = arith.index_cast %104 : i32 to index
    %c3_69 = arith.constant 3 : index
    %106 = memref.load %arg1[%105, %c3_69] : memref<16x4xi32, #tpu.memory_space<smem>>
    %107 = arith.index_cast %106 : i32 to index
    %c0_70 = arith.constant 0 : index
    %108 = vector.load %arg12[%107, %c0_70] : memref<128x32xf32, #tpu.memory_space<vmem>>, vector<1x32xf32>
    %c2_71 = arith.constant 2 : index
    %c96_72 = arith.constant 96 : index
    %109 = vector.load %arg13[%c2_71, %c96_72] : memref<8x128xf32, #tpu.memory_space<vmem>>, vector<1x32xf32>
    tpu.vector_store %arg13[%c2_71, %c96_72], %108 {strides = array<i32>} : memref<8x128xf32, #tpu.memory_space<vmem>>, vector<1x32xf32>,
    %c8_i32_73 = arith.constant 8 : i32
    %110 = arith.muli %arg0, %c8_i32_73 : i32
    %c3_i32 = arith.constant 3 : i32
    %111 = arith.addi %110, %c3_i32 : i32
    %112 = arith.index_cast %111 : i32 to index
    %c0_74 = arith.constant 0 : index
    %113 = memref.load %arg1[%112, %c0_74] : memref<16x4xi32, #tpu.memory_space<smem>>
    %114 = arith.index_cast %113 : i32 to index
    %c0_75 = arith.constant 0 : index
    %115 = vector.load %arg12[%114, %c0_75] : memref<128x32xf32, #tpu.memory_space<vmem>>, vector<1x32xf32>
    %c3_76 = arith.constant 3 : index
    %c0_77 = arith.constant 0 : index
    %116 = vector.load %arg13[%c3_76, %c0_77] : memref<8x128xf32, #tpu.memory_space<vmem>>, vector<1x32xf32>
    tpu.vector_store %arg13[%c3_76, %c0_77], %115 {strides = array<i32>} : memref<8x128xf32, #tpu.memory_space<vmem>>, vector<1x32xf32>,
    %c8_i32_78 = arith.constant 8 : i32
    %117 = arith.muli %arg0, %c8_i32_78 : i32
    %c3_i32_79 = arith.constant 3 : i32
    %118 = arith.addi %117, %c3_i32_79 : i32
    %119 = arith.index_cast %118 : i32 to index
    %c1_80 = arith.constant 1 : index
    %120 = memref.load %arg1[%119, %c1_80] : memref<16x4xi32, #tpu.memory_space<smem>>
    %121 = arith.index_cast %120 : i32 to index
    %c0_81 = arith.constant 0 : index
    %122 = vector.load %arg12[%121, %c0_81] : memref<128x32xf32, #tpu.memory_space<vmem>>, vector<1x32xf32>
    %c3_82 = arith.constant 3 : index
    %c32_83 = arith.constant 32 : index
    %123 = vector.load %arg13[%c3_82, %c32_83] : memref<8x128xf32, #tpu.memory_space<vmem>>, vector<1x32xf32>
    tpu.vector_store %arg13[%c3_82, %c32_83], %122 {strides = array<i32>} : memref<8x128xf32, #tpu.memory_space<vmem>>, vector<1x32xf32>,
    %c8_i32_84 = arith.constant 8 : i32
    %124 = arith.muli %arg0, %c8_i32_84 : i32
    %c3_i32_85 = arith.constant 3 : i32
    %125 = arith.addi %124, %c3_i32_85 : i32
    %126 = arith.index_cast %125 : i32 to index
    %c2_86 = arith.constant 2 : index
    %127 = memref.load %arg1[%126, %c2_86] : memref<16x4xi32, #tpu.memory_space<smem>>
    %128 = arith.index_cast %127 : i32 to index
    %c0_87 = arith.constant 0 : index
    %129 = vector.load %arg12[%128, %c0_87] : memref<128x32xf32, #tpu.memory_space<vmem>>, vector<1x32xf32>
    %c3_88 = arith.constant 3 : index
    %c64_89 = arith.constant 64 : index
    %130 = vector.load %arg13[%c3_88, %c64_89] : memref<8x128xf32, #tpu.memory_space<vmem>>, vector<1x32xf32>
    tpu.vector_store %arg13[%c3_88, %c64_89], %129 {strides = array<i32>} : memref<8x128xf32, #tpu.memory_space<vmem>>, vector<1x32xf32>,
    %c8_i32_90 = arith.constant 8 : i32
    %131 = arith.muli %arg0, %c8_i32_90 : i32
    %c3_i32_91 = arith.constant 3 : i32
    %132 = arith.addi %131, %c3_i32_91 : i32
    %133 = arith.index_cast %132 : i32 to index
    %c3_92 = arith.constant 3 : index
    %134 = memref.load %arg1[%133, %c3_92] : memref<16x4xi32, #tpu.memory_space<smem>>
    %135 = arith.index_cast %134 : i32 to index
    %c0_93 = arith.constant 0 : index
    %136 = vector.load %arg12[%135, %c0_93] : memref<128x32xf32, #tpu.memory_space<vmem>>, vector<1x32xf32>
    %c3_94 = arith.constant 3 : index
    %c96_95 = arith.constant 96 : index
    %137 = vector.load %arg13[%c3_94, %c96_95] : memref<8x128xf32, #tpu.memory_space<vmem>>, vector<1x32xf32>
    tpu.vector_store %arg13[%c3_94, %c96_95], %136 {strides = array<i32>} : memref<8x128xf32, #tpu.memory_space<vmem>>, vector<1x32xf32>,
    %c8_i32_96 = arith.constant 8 : i32
    %138 = arith.muli %arg0, %c8_i32_96 : i32
    %c4_i32 = arith.constant 4 : i32
    %139 = arith.addi %138, %c4_i32 : i32
    %140 = arith.index_cast %139 : i32 to index
    %c0_97 = arith.constant 0 : index
    %141 = memref.load %arg1[%140, %c0_97] : memref<16x4xi32, #tpu.memory_space<smem>>
    %142 = arith.index_cast %141 : i32 to index
    %c0_98 = arith.constant 0 : index
    %143 = vector.load %arg12[%142, %c0_98] : memref<128x32xf32, #tpu.memory_space<vmem>>, vector<1x32xf32>
    %c4 = arith.constant 4 : index
    %c0_99 = arith.constant 0 : index
    %144 = vector.load %arg13[%c4, %c0_99] : memref<8x128xf32, #tpu.memory_space<vmem>>, vector<1x32xf32>
    tpu.vector_store %arg13[%c4, %c0_99], %143 {strides = array<i32>} : memref<8x128xf32, #tpu.memory_space<vmem>>, vector<1x32xf32>,
    %c8_i32_100 = arith.constant 8 : i32
    %145 = arith.muli %arg0, %c8_i32_100 : i32
    %c4_i32_101 = arith.constant 4 : i32
    %146 = arith.addi %145, %c4_i32_101 : i32
    %147 = arith.index_cast %146 : i32 to index
    %c1_102 = arith.constant 1 : index
    %148 = memref.load %arg1[%147, %c1_102] : memref<16x4xi32, #tpu.memory_space<smem>>
    %149 = arith.index_cast %148 : i32 to index
    %c0_103 = arith.constant 0 : index
    %150 = vector.load %arg12[%149, %c0_103] : memref<128x32xf32, #tpu.memory_space<vmem>>, vector<1x32xf32>
    %c4_104 = arith.constant 4 : index
    %c32_105 = arith.constant 32 : index
    %151 = vector.load %arg13[%c4_104, %c32_105] : memref<8x128xf32, #tpu.memory_space<vmem>>, vector<1x32xf32>
    tpu.vector_store %arg13[%c4_104, %c32_105], %150 {strides = array<i32>} : memref<8x128xf32, #tpu.memory_space<vmem>>, vector<1x32xf32>,
    %c8_i32_106 = arith.constant 8 : i32
    %152 = arith.muli %arg0, %c8_i32_106 : i32
    %c4_i32_107 = arith.constant 4 : i32
    %153 = arith.addi %152, %c4_i32_107 : i32
    %154 = arith.index_cast %153 : i32 to index
    %c2_108 = arith.constant 2 : index
    %155 = memref.load %arg1[%154, %c2_108] : memref<16x4xi32, #tpu.memory_space<smem>>
    %156 = arith.index_cast %155 : i32 to index
    %c0_109 = arith.constant 0 : index
    %157 = vector.load %arg12[%156, %c0_109] : memref<128x32xf32, #tpu.memory_space<vmem>>, vector<1x32xf32>
    %c4_110 = arith.constant 4 : index
    %c64_111 = arith.constant 64 : index
    %158 = vector.load %arg13[%c4_110, %c64_111] : memref<8x128xf32, #tpu.memory_space<vmem>>, vector<1x32xf32>
    tpu.vector_store %arg13[%c4_110, %c64_111], %157 {strides = array<i32>} : memref<8x128xf32, #tpu.memory_space<vmem>>, vector<1x32xf32>,
    %c8_i32_112 = arith.constant 8 : i32
    %159 = arith.muli %arg0, %c8_i32_112 : i32
    %c4_i32_113 = arith.constant 4 : i32
    %160 = arith.addi %159, %c4_i32_113 : i32
    %161 = arith.index_cast %160 : i32 to index
    %c3_114 = arith.constant 3 : index
    %162 = memref.load %arg1[%161, %c3_114] : memref<16x4xi32, #tpu.memory_space<smem>>
    %163 = arith.index_cast %162 : i32 to index
    %c0_115 = arith.constant 0 : index
    %164 = vector.load %arg12[%163, %c0_115] : memref<128x32xf32, #tpu.memory_space<vmem>>, vector<1x32xf32>
    %c4_116 = arith.constant 4 : index
    %c96_117 = arith.constant 96 : index
    %165 = vector.load %arg13[%c4_116, %c96_117] : memref<8x128xf32, #tpu.memory_space<vmem>>, vector<1x32xf32>
    tpu.vector_store %arg13[%c4_116, %c96_117], %164 {strides = array<i32>} : memref<8x128xf32, #tpu.memory_space<vmem>>, vector<1x32xf32>,
    %c8_i32_118 = arith.constant 8 : i32
    %166 = arith.muli %arg0, %c8_i32_118 : i32
    %c5_i32 = arith.constant 5 : i32
    %167 = arith.addi %166, %c5_i32 : i32
    %168 = arith.index_cast %167 : i32 to index
    %c0_119 = arith.constant 0 : index
    %169 = memref.load %arg1[%168, %c0_119] : memref<16x4xi32, #tpu.memory_space<smem>>
    %170 = arith.index_cast %169 : i32 to index
    %c0_120 = arith.constant 0 : index
    %171 = vector.load %arg12[%170, %c0_120] : memref<128x32xf32, #tpu.memory_space<vmem>>, vector<1x32xf32>
    %c5 = arith.constant 5 : index
    %c0_121 = arith.constant 0 : index
    %172 = vector.load %arg13[%c5, %c0_121] : memref<8x128xf32, #tpu.memory_space<vmem>>, vector<1x32xf32>
    tpu.vector_store %arg13[%c5, %c0_121], %171 {strides = array<i32>} : memref<8x128xf32, #tpu.memory_space<vmem>>, vector<1x32xf32>,
    %c8_i32_122 = arith.constant 8 : i32
    %173 = arith.muli %arg0, %c8_i32_122 : i32
    %c5_i32_123 = arith.constant 5 : i32
    %174 = arith.addi %173, %c5_i32_123 : i32
    %175 = arith.index_cast %174 : i32 to index
    %c1_124 = arith.constant 1 : index
    %176 = memref.load %arg1[%175, %c1_124] : memref<16x4xi32, #tpu.memory_space<smem>>
    %177 = arith.index_cast %176 : i32 to index
    %c0_125 = arith.constant 0 : index
    %178 = vector.load %arg12[%177, %c0_125] : memref<128x32xf32, #tpu.memory_space<vmem>>, vector<1x32xf32>
    %c5_126 = arith.constant 5 : index
    %c32_127 = arith.constant 32 : index
    %179 = vector.load %arg13[%c5_126, %c32_127] : memref<8x128xf32, #tpu.memory_space<vmem>>, vector<1x32xf32>
    tpu.vector_store %arg13[%c5_126, %c32_127], %178 {strides = array<i32>} : memref<8x128xf32, #tpu.memory_space<vmem>>, vector<1x32xf32>,
    %c8_i32_128 = arith.constant 8 : i32
    %180 = arith.muli %arg0, %c8_i32_128 : i32
    %c5_i32_129 = arith.constant 5 : i32
    %181 = arith.addi %180, %c5_i32_129 : i32
    %182 = arith.index_cast %181 : i32 to index
    %c2_130 = arith.constant 2 : index
    %183 = memref.load %arg1[%182, %c2_130] : memref<16x4xi32, #tpu.memory_space<smem>>
    %184 = arith.index_cast %183 : i32 to index
    %c0_131 = arith.constant 0 : index
    %185 = vector.load %arg12[%184, %c0_131] : memref<128x32xf32, #tpu.memory_space<vmem>>, vector<1x32xf32>
    %c5_132 = arith.constant 5 : index
    %c64_133 = arith.constant 64 : index
    %186 = vector.load %arg13[%c5_132, %c64_133] : memref<8x128xf32, #tpu.memory_space<vmem>>, vector<1x32xf32>
    tpu.vector_store %arg13[%c5_132, %c64_133], %185 {strides = array<i32>} : memref<8x128xf32, #tpu.memory_space<vmem>>, vector<1x32xf32>,
    %c8_i32_134 = arith.constant 8 : i32
    %187 = arith.muli %arg0, %c8_i32_134 : i32
    %c5_i32_135 = arith.constant 5 : i32
    %188 = arith.addi %187, %c5_i32_135 : i32
    %189 = arith.index_cast %188 : i32 to index
    %c3_136 = arith.constant 3 : index
    %190 = memref.load %arg1[%189, %c3_136] : memref<16x4xi32, #tpu.memory_space<smem>>
    %191 = arith.index_cast %190 : i32 to index
    %c0_137 = arith.constant 0 : index
    %192 = vector.load %arg12[%191, %c0_137] : memref<128x32xf32, #tpu.memory_space<vmem>>, vector<1x32xf32>
    %c5_138 = arith.constant 5 : index
    %c96_139 = arith.constant 96 : index
    %193 = vector.load %arg13[%c5_138, %c96_139] : memref<8x128xf32, #tpu.memory_space<vmem>>, vector<1x32xf32>
    tpu.vector_store %arg13[%c5_138, %c96_139], %192 {strides = array<i32>} : memref<8x128xf32, #tpu.memory_space<vmem>>, vector<1x32xf32>,
    %c8_i32_140 = arith.constant 8 : i32
    %194 = arith.muli %arg0, %c8_i32_140 : i32
    %c6_i32 = arith.constant 6 : i32
    %195 = arith.addi %194, %c6_i32 : i32
    %196 = arith.index_cast %195 : i32 to index
    %c0_141 = arith.constant 0 : index
    %197 = memref.load %arg1[%196, %c0_141] : memref<16x4xi32, #tpu.memory_space<smem>>
    %198 = arith.index_cast %197 : i32 to index
    %c0_142 = arith.constant 0 : index
    %199 = vector.load %arg12[%198, %c0_142] : memref<128x32xf32, #tpu.memory_space<vmem>>, vector<1x32xf32>
    %c6 = arith.constant 6 : index
    %c0_143 = arith.constant 0 : index
    %200 = vector.load %arg13[%c6, %c0_143] : memref<8x128xf32, #tpu.memory_space<vmem>>, vector<1x32xf32>
    tpu.vector_store %arg13[%c6, %c0_143], %199 {strides = array<i32>} : memref<8x128xf32, #tpu.memory_space<vmem>>, vector<1x32xf32>,
    %c8_i32_144 = arith.constant 8 : i32
    %201 = arith.muli %arg0, %c8_i32_144 : i32
    %c6_i32_145 = arith.constant 6 : i32
    %202 = arith.addi %201, %c6_i32_145 : i32
    %203 = arith.index_cast %202 : i32 to index
    %c1_146 = arith.constant 1 : index
    %204 = memref.load %arg1[%203, %c1_146] : memref<16x4xi32, #tpu.memory_space<smem>>
    %205 = arith.index_cast %204 : i32 to index
    %c0_147 = arith.constant 0 : index
    %206 = vector.load %arg12[%205, %c0_147] : memref<128x32xf32, #tpu.memory_space<vmem>>, vector<1x32xf32>
    %c6_148 = arith.constant 6 : index
    %c32_149 = arith.constant 32 : index
    %207 = vector.load %arg13[%c6_148, %c32_149] : memref<8x128xf32, #tpu.memory_space<vmem>>, vector<1x32xf32>
    tpu.vector_store %arg13[%c6_148, %c32_149], %206 {strides = array<i32>} : memref<8x128xf32, #tpu.memory_space<vmem>>, vector<1x32xf32>,
    %c8_i32_150 = arith.constant 8 : i32
    %208 = arith.muli %arg0, %c8_i32_150 : i32
    %c6_i32_151 = arith.constant 6 : i32
    %209 = arith.addi %208, %c6_i32_151 : i32
    %210 = arith.index_cast %209 : i32 to index
    %c2_152 = arith.constant 2 : index
    %211 = memref.load %arg1[%210, %c2_152] : memref<16x4xi32, #tpu.memory_space<smem>>
    %212 = arith.index_cast %211 : i32 to index
    %c0_153 = arith.constant 0 : index
    %213 = vector.load %arg12[%212, %c0_153] : memref<128x32xf32, #tpu.memory_space<vmem>>, vector<1x32xf32>
    %c6_154 = arith.constant 6 : index
    %c64_155 = arith.constant 64 : index
    %214 = vector.load %arg13[%c6_154, %c64_155] : memref<8x128xf32, #tpu.memory_space<vmem>>, vector<1x32xf32>
    tpu.vector_store %arg13[%c6_154, %c64_155], %213 {strides = array<i32>} : memref<8x128xf32, #tpu.memory_space<vmem>>, vector<1x32xf32>,
    %c8_i32_156 = arith.constant 8 : i32
    %215 = arith.muli %arg0, %c8_i32_156 : i32
    %c6_i32_157 = arith.constant 6 : i32
    %216 = arith.addi %215, %c6_i32_157 : i32
    %217 = arith.index_cast %216 : i32 to index
    %c3_158 = arith.constant 3 : index
    %218 = memref.load %arg1[%217, %c3_158] : memref<16x4xi32, #tpu.memory_space<smem>>
    %219 = arith.index_cast %218 : i32 to index
    %c0_159 = arith.constant 0 : index
    %220 = vector.load %arg12[%219, %c0_159] : memref<128x32xf32, #tpu.memory_space<vmem>>, vector<1x32xf32>
    %c6_160 = arith.constant 6 : index
    %c96_161 = arith.constant 96 : index
    %221 = vector.load %arg13[%c6_160, %c96_161] : memref<8x128xf32, #tpu.memory_space<vmem>>, vector<1x32xf32>
    tpu.vector_store %arg13[%c6_160, %c96_161], %220 {strides = array<i32>} : memref<8x128xf32, #tpu.memory_space<vmem>>, vector<1x32xf32>,
    %c8_i32_162 = arith.constant 8 : i32
    %222 = arith.muli %arg0, %c8_i32_162 : i32
    %c7_i32 = arith.constant 7 : i32
    %223 = arith.addi %222, %c7_i32 : i32
    %224 = arith.index_cast %223 : i32 to index
    %c0_163 = arith.constant 0 : index
    %225 = memref.load %arg1[%224, %c0_163] : memref<16x4xi32, #tpu.memory_space<smem>>
    %226 = arith.index_cast %225 : i32 to index
    %c0_164 = arith.constant 0 : index
    %227 = vector.load %arg12[%226, %c0_164] : memref<128x32xf32, #tpu.memory_space<vmem>>, vector<1x32xf32>
    %c7 = arith.constant 7 : index
    %c0_165 = arith.constant 0 : index
    %228 = vector.load %arg13[%c7, %c0_165] : memref<8x128xf32, #tpu.memory_space<vmem>>, vector<1x32xf32>
    tpu.vector_store %arg13[%c7, %c0_165], %227 {strides = array<i32>} : memref<8x128xf32, #tpu.memory_space<vmem>>, vector<1x32xf32>,
    %c8_i32_166 = arith.constant 8 : i32
    %229 = arith.muli %arg0, %c8_i32_166 : i32
    %c7_i32_167 = arith.constant 7 : i32
    %230 = arith.addi %229, %c7_i32_167 : i32
    %231 = arith.index_cast %230 : i32 to index
    %c1_168 = arith.constant 1 : index
    %232 = memref.load %arg1[%231, %c1_168] : memref<16x4xi32, #tpu.memory_space<smem>>
    %233 = arith.index_cast %232 : i32 to index
    %c0_169 = arith.constant 0 : index
    %234 = vector.load %arg12[%233, %c0_169] : memref<128x32xf32, #tpu.memory_space<vmem>>, vector<1x32xf32>
    %c7_170 = arith.constant 7 : index
    %c32_171 = arith.constant 32 : index
    %235 = vector.load %arg13[%c7_170, %c32_171] : memref<8x128xf32, #tpu.memory_space<vmem>>, vector<1x32xf32>
    tpu.vector_store %arg13[%c7_170, %c32_171], %234 {strides = array<i32>} : memref<8x128xf32, #tpu.memory_space<vmem>>, vector<1x32xf32>,
    %c8_i32_172 = arith.constant 8 : i32
    %236 = arith.muli %arg0, %c8_i32_172 : i32
    %c7_i32_173 = arith.constant 7 : i32
    %237 = arith.addi %236, %c7_i32_173 : i32
    %238 = arith.index_cast %237 : i32 to index
    %c2_174 = arith.constant 2 : index
    %239 = memref.load %arg1[%238, %c2_174] : memref<16x4xi32, #tpu.memory_space<smem>>
    %240 = arith.index_cast %239 : i32 to index
    %c0_175 = arith.constant 0 : index
    %241 = vector.load %arg12[%240, %c0_175] : memref<128x32xf32, #tpu.memory_space<vmem>>, vector<1x32xf32>
    %c7_176 = arith.constant 7 : index
    %c64_177 = arith.constant 64 : index
    %242 = vector.load %arg13[%c7_176, %c64_177] : memref<8x128xf32, #tpu.memory_space<vmem>>, vector<1x32xf32>
    tpu.vector_store %arg13[%c7_176, %c64_177], %241 {strides = array<i32>} : memref<8x128xf32, #tpu.memory_space<vmem>>, vector<1x32xf32>,
    %c8_i32_178 = arith.constant 8 : i32
    %243 = arith.muli %arg0, %c8_i32_178 : i32
    %c7_i32_179 = arith.constant 7 : i32
    %244 = arith.addi %243, %c7_i32_179 : i32
    %245 = arith.index_cast %244 : i32 to index
    %c3_180 = arith.constant 3 : index
    %246 = memref.load %arg1[%245, %c3_180] : memref<16x4xi32, #tpu.memory_space<smem>>
    %247 = arith.index_cast %246 : i32 to index
    %c0_181 = arith.constant 0 : index
    %248 = vector.load %arg12[%247, %c0_181] : memref<128x32xf32, #tpu.memory_space<vmem>>, vector<1x32xf32>
    %c7_182 = arith.constant 7 : index
    %c96_183 = arith.constant 96 : index
    %249 = vector.load %arg13[%c7_182, %c96_183] : memref<8x128xf32, #tpu.memory_space<vmem>>, vector<1x32xf32>
    tpu.vector_store %arg13[%c7_182, %c96_183], %248 {strides = array<i32>} : memref<8x128xf32, #tpu.memory_space<vmem>>, vector<1x32xf32>,
    %c0_184 = arith.constant 0 : index
    %c0_185 = arith.constant 0 : index
    %250 = vector.load %arg13[%c0_184, %c0_185] : memref<8x128xf32, #tpu.memory_space<vmem>>, vector<8x128xf32>
    %251 = arith.truncf %250 : vector<8x128xf32> to vector<8x128xbf16>
    %c0_186 = arith.constant 0 : index
    %c0_187 = arith.constant 0 : index
    %252 = vector.load %arg5[%c0_186, %c0_187] : memref<128x32xbf16, #tpu.memory_space<vmem>>, vector<128x32xbf16>
    %cst_188 = arith.constant dense<0.000000e+00> : vector<8x32xf32>
    %253 = tpu.matmul %251, %252, %cst_188 {dimension_numbers = #tpu.dot_dimension_numbers<[1], [0], [0], [1], [0, 0, 1, 1], [], []>} : vector<8x128xbf16>, vector<128x32xbf16>, vector<8x32xf32> -> vector<8x32xf32>
    %c0_189 = arith.constant 0 : index
    %c0_190 = arith.constant 0 : index
    %254 = vector.load %arg6[%c0_189, %c0_190] : memref<1x32xf32, #tpu.memory_space<vmem>>, vector<1x32xf32>
    %255 = vector.broadcast %254 : vector<1x32xf32> to vector<8x32xf32>
    %256 = arith.addf %253, %255 : vector<8x32xf32>
    %c0_191 = arith.constant 0 : index
    %c0_192 = arith.constant 0 : index
    %257 = vector.load %arg7[%c0_191, %c0_192] : memref<1x32xf32, #tpu.memory_space<vmem>>, vector<1x32xf32>
    %c0_193 = arith.constant 0 : index
    %c0_194 = arith.constant 0 : index
    %258 = vector.load %arg8[%c0_193, %c0_194] : memref<1x32xf32, #tpu.memory_space<vmem>>, vector<1x32xf32>
    %cst_195 = arith.constant dense<0.000000e+00> : vector<8xf32>
    %259 = vector.multi_reduction <add>, %256, %cst_195 [1] : vector<8x32xf32> to vector<8xf32>
    %260 = vector.shape_cast %259 : vector<8xf32> to vector<8x1xf32>
    %cst_196 = arith.constant 3.200000e+01 : f32
    %261 = vector.broadcast %cst_196 : f32 to vector<8x1xf32>
    %262 = arith.divf %260, %261 : vector<8x1xf32>
    %263 = vector.broadcast %262 : vector<8x1xf32> to vector<8x32xf32>
    %264 = arith.subf %256, %263 : vector<8x32xf32>
    %265 = arith.mulf %264, %264 : vector<8x32xf32>
    %cst_197 = arith.constant dense<0.000000e+00> : vector<8xf32>
    %266 = vector.multi_reduction <add>, %265, %cst_197 [1] : vector<8x32xf32> to vector<8xf32>
    %267 = vector.shape_cast %266 : vector<8xf32> to vector<8x1xf32>
    %cst_198 = arith.constant 3.200000e+01 : f32
    %268 = vector.broadcast %cst_198 : f32 to vector<8x1xf32>
    %269 = arith.divf %267, %268 : vector<8x1xf32>
    %270 = vector.broadcast %262 : vector<8x1xf32> to vector<8x32xf32>
    %271 = arith.subf %256, %270 : vector<8x32xf32>
    %cst_199 = arith.constant 9.99999974E-6 : f32
    %272 = vector.broadcast %cst_199 : f32 to vector<8x1xf32>
    %273 = arith.addf %269, %272 : vector<8x1xf32>
    %274 = math.rsqrt %273 : vector<8x1xf32>
    %275 = vector.broadcast %274 : vector<8x1xf32> to vector<8x32xf32>
    %276 = arith.mulf %271, %275 : vector<8x32xf32>
    %277 = vector.broadcast %257 : vector<1x32xf32> to vector<8x32xf32>
    %278 = arith.mulf %276, %277 : vector<8x32xf32>
    %279 = vector.broadcast %258 : vector<1x32xf32> to vector<8x32xf32>
    %280 = arith.addf %278, %279 : vector<8x32xf32>
    %cst_200 = arith.constant 0.000000e+00 : f32
    %281 = vector.broadcast %cst_200 : f32 to vector<8x32xf32>
    %282 = arith.maximumf %280, %281 : vector<8x32xf32>
    %283 = arith.truncf %282 : vector<8x32xf32> to vector<8x32xbf16>
    %c0_201 = arith.constant 0 : index
    %c0_202 = arith.constant 0 : index
    %284 = vector.load %arg9[%c0_201, %c0_202] : memref<32x128xbf16, #tpu.memory_space<vmem>>, vector<32x128xbf16>
    %cst_203 = arith.constant dense<0.000000e+00> : vector<8x128xf32>
    %285 = tpu.matmul %283, %284, %cst_203 {dimension_numbers = #tpu.dot_dimension_numbers<[1], [0], [0], [1], [0, 0, 1, 1], [], []>} : vector<8x32xbf16>, vector<32x128xbf16>, vector<8x128xf32> -> vector<8x128xf32>
    %c0_204 = arith.constant 0 : index
    %c0_205 = arith.constant 0 : index
    %286 = vector.load %arg10[%c0_204, %c0_205] : memref<1x128xf32, #tpu.memory_space<vmem>>, vector<1x128xf32>
    %287 = vector.broadcast %286 : vector<1x128xf32> to vector<8x128xf32>
    %288 = arith.addf %285, %287 : vector<8x128xf32>
    %cst_206 = arith.constant dense<0xFF800000> : vector<8xf32>
    %289 = vector.multi_reduction <maximumf>, %288, %cst_206 [1] : vector<8x128xf32> to vector<8xf32>
    %290 = vector.shape_cast %289 : vector<8xf32> to vector<8x1xf32>
    %291 = vector.broadcast %290 : vector<8x1xf32> to vector<8x128xf32>
    %292 = arith.subf %288, %291 : vector<8x128xf32>
    %293 = math.exp %292 : vector<8x128xf32>
    %cst_207 = arith.constant dense<0.000000e+00> : vector<8xf32>
    %294 = vector.multi_reduction <add>, %293, %cst_207 [1] : vector<8x128xf32> to vector<8xf32>
    %295 = vector.shape_cast %294 : vector<8xf32> to vector<8x1xf32>
    %296 = math.log %295 : vector<8x1xf32>
    %297 = arith.addf %290, %296 : vector<8x1xf32>
    %298 = vector.broadcast %297 : vector<8x1xf32> to vector<8x128xf32>
    %299 = arith.subf %288, %298 : vector<8x128xf32>
    %c0_208 = arith.constant 0 : index
    %c0_209 = arith.constant 0 : index
    %300 = vector.load %arg11[%c0_208, %c0_209] : memref<8x128xf32, #tpu.memory_space<vmem>>, vector<8x128xf32>
    tpu.vector_store %arg11[%c0_208, %c0_209], %299 {strides = array<i32>} : memref<8x128xf32, #tpu.memory_space<vmem>>, vector<8x128xf32>,
    return
  }
  func.func @transform_0(%arg0: i32, %arg1: memref<16x4xi32, #tpu.memory_space<smem>>) -> (i32, i32) {
    %c0_i32 = arith.constant 0 : i32
    %c0_i32_0 = arith.constant 0 : i32
    %c0_i32_1 = arith.constant 0 : i32
    return %c0_i32, %c0_i32_0 : i32, i32
  }
  func.func @transform_1(%arg0: i32, %arg1: memref<16x4xi32, #tpu.memory_space<smem>>) -> (i32, i32) {
    %c0_i32 = arith.constant 0 : i32
    %c0_i32_0 = arith.constant 0 : i32
    %c0_i32_1 = arith.constant 0 : i32
    return %c0_i32, %c0_i32_0 : i32, i32
  }
  func.func @transform_2(%arg0: i32, %arg1: memref<16x4xi32, #tpu.memory_space<smem>>) -> (i32, i32) {
    %c0_i32 = arith.constant 0 : i32
    %c0_i32_0 = arith.constant 0 : i32
    %c0_i32_1 = arith.constant 0 : i32
    return %c0_i32, %c0_i32_0 : i32, i32
  }
  func.func @transform_3(%arg0: i32, %arg1: memref<16x4xi32, #tpu.memory_space<smem>>) -> (i32, i32) {
    %c0_i32 = arith.constant 0 : i32
    %c0_i32_0 = arith.constant 0 : i32
    %c0_i32_1 = arith.constant 0 : i32
    return %c0_i32, %c0_i32_0 : i32, i32
  }
  func.func @transform_4(%arg0: i32, %arg1: memref<16x4xi32, #tpu.memory_space<smem>>) -> (i32, i32) {
    %c0_i32 = arith.constant 0 : i32
    %c0_i32_0 = arith.constant 0 : i32
    %c0_i32_1 = arith.constant 0 : i32
    return %c0_i32, %c0_i32_0 : i32, i32
  }
  func.func @transform_5(%arg0: i32, %arg1: memref<16x4xi32, #tpu.memory_space<smem>>) -> (i32, i32) {
    %c0_i32 = arith.constant 0 : i32
    %c0_i32_0 = arith.constant 0 : i32
    %c0_i32_1 = arith.constant 0 : i32
    return %c0_i32, %c0_i32_0 : i32, i32
  }
  func.func @transform_6(%arg0: i32, %arg1: memref<16x4xi32, #tpu.memory_space<smem>>) -> (i32, i32) {
    %c0_i32 = arith.constant 0 : i32
    %c0_i32_0 = arith.constant 0 : i32
    %c0_i32_1 = arith.constant 0 : i32
    return %c0_i32, %c0_i32_0 : i32, i32
  }
  func.func @transform_7(%arg0: i32, %arg1: memref<16x4xi32, #tpu.memory_space<smem>>) -> (i32, i32) {
    %c0_i32 = arith.constant 0 : i32
    %c0_i32_0 = arith.constant 0 : i32
    %c0_i32_1 = arith.constant 0 : i32
    return %c0_i32, %c0_i32_0 : i32, i32
  }
  func.func @transform_8(%arg0: i32, %arg1: memref<16x4xi32, #tpu.memory_space<smem>>) -> (i32, i32) {
    %c0_i32 = arith.constant 0 : i32
    %c0_i32_0 = arith.constant 0 : i32
    %c0_i32_1 = arith.constant 0 : i32
    return %c0_i32, %c0_i32_0 : i32, i32
  }
  func.func @transform_9(%arg0: i32, %arg1: memref<16x4xi32, #tpu.memory_space<smem>>) -> (i32, i32) {
    %c0_i32 = arith.constant 0 : i32
    %c0_i32_0 = arith.constant 0 : i32
    return %arg0, %c0_i32 : i32, i32
  }
}

</mosaic_0001>

<llo_original>
// kernel: ffnn_lm_forward.1
$region0: #{ffnn_lm_forward.1}
  #allocation0 [shape = 'u32[]', space=smem, size = 0x4, offset = 0x4, fixed_abs, tag = 'smem constant byte address 0x4 - core index']
  #allocation1 [shape = 'u32[144,128]{1,0:T(1,128)}', space=vmem, size = 0x12000, scoped, tag = 'internal scratch']
  #allocation2 [shape = 'f32[128,32]{1,0:T(8,128)}', space=vmem, size = 0x10000, scoped, tag = 'scratch operand']
  #allocation3 [shape = 'f32[8,128]{1,0:T(8,128)}', space=vmem, size = 0x1000, scoped, tag = 'scratch operand']
  #allocation4 [shape = 's32[1]{0}', space=sflag, size = 0x4, scoped, tag = 'scoped memory for ffnn_lm_forward.1']
  #allocation5 [shape = 'u8[8192]{0}', space=smem, size = 0x2000, scoped, tag = 'prefetched SMEM operand 0']
  %s0 = inlined_call_operand.vmem [shape: s32[16,4], index: 0, kind: input, shape index: {}]
  %s1 = inlined_call_operand.vmem [shape: f32[128,32], index: 1, kind: input, shape index: {}]
  %s2 = inlined_call_operand.vmem [shape: f32[1,32], index: 2, kind: input, shape index: {}]
  %s3 = inlined_call_operand.vmem [shape: f32[1,32], index: 3, kind: input, shape index: {}]
  %s4 = inlined_call_operand.vmem [shape: bf16[128,32], index: 4, kind: input, shape index: {}]
  %s5 = inlined_call_operand.vmem [shape: f32[1,32], index: 5, kind: input, shape index: {}]
  %s6 = inlined_call_operand.vmem [shape: f32[1,32], index: 6, kind: input, shape index: {}]
  %s7 = inlined_call_operand.vmem [shape: f32[1,32], index: 7, kind: input, shape index: {}]
  %s8 = inlined_call_operand.vmem [shape: bf16[32,128], index: 8, kind: input, shape index: {}]
  %s9 = inlined_call_operand.vmem [shape: f32[1,128], index: 9, kind: input, shape index: {}]
  %s10 = inlined_call_operand.hbm [shape: f32[16,128], index: 10, kind: output, shape index: {}]
  %s11 = sld [smem:[#allocation0]]
  $region69: #{ffnn_lm_forward.1} parent=0
    _
  %s13 = ssub.s32 1, %s11
  %s14 = scalar_select 0, %s13, %s11
  %s15 = sshll.u32 %s0, 4
  %s16 = int_to_ptr.vmem [resolvable:$true] %s15
  %18 = dma.vmem_to_smem %s16, 256, [#allocation5], [#allocation4]
  %19 = dma.done [#allocation4], 256
  %20 = sfence
  $region1: #{ffnn_lm_forward.1} parent=0
    #allocation6 [shape = 'u8[8192]{0}', space=vmem, size = 0x2000, scoped, tag = 'output window, operand 0']
    #allocation7 [shape = 's32[2]{0}', space=sflag, size = 0x8, scoped, tag = 'scoped memory for ffnn_lm_forward.1']
    %21 = vsyncpa [#allocation7], 0
    %s22 = scalar_lea.sflag [#allocation7], 1
    %23 = vsyncpa %s22, 0
    loop: start=0, step=1, limit=4
    $region2: #{ffnn_lm_forward.1} parent=1 // loop_pre_header
      _
    $region3: #{ffnn_lm_forward.1} parent=1 // loop_header
      %s25 = sphi 0, %s29
      %p26 = scmp.ge.s32.totalorder %s25, 4
      %s33 = sphi 0, %s33
      %s35 = sphi 0, %s33
      %s36 = sphi 0, %s35
      %s50 = sphi 0, %s36
      %s54 = sphi 0, %s54
      %s56 = sphi 0, %s54
      %s57 = sphi 0, %s56
      %s71 = sphi 0, %s57
      %s75 = sphi 0, %s75
      %s77 = sphi 0, %s75
      %s78 = sphi 0, %s77
      %s92 = sphi 0, %s78
      %s96 = sphi 0, %s96
      %s98 = sphi 0, %s96
      %s99 = sphi 0, %s98
      %s113 = sphi 0, %s99
      %s117 = sphi 0, %s117
      %s119 = sphi 0, %s117
      %s120 = sphi 0, %s119
      %s134 = sphi 0, %s120
      %s138 = sphi 0, %s138
      %s140 = sphi 0, %s138
      %s141 = sphi 0, %s140
      %s155 = sphi 0, %s141
      %s159 = sphi 0, %s159
      %s161 = sphi 0, %s159
      %s162 = sphi 0, %s161
      %s176 = sphi 0, %s162
      %s180 = sphi 0, %s180
      %s182 = sphi 0, %s180
      %s183 = sphi 0, %s182
      %s197 = sphi 0, %s183
      %s201 = sphi 0, %s201
      %s203 = sphi 0, %s201
      %s204 = sphi 0, %s203
      %s218 = sphi 0, %s204
      %s224 = sphi 0, %s226
      %s227 = sphi 0, %s224
      %s228 = sphi 0, %s227
      %s244 = sphi 0, %s228
    $region4: #{ffnn_lm_forward.1} parent=1 // loop_header_branch
      %28 = sbr.rel (%p26) target = $region8
    $region5: #{ffnn_lm_forward.1} parent=1 // loop_body
      %s30 = ssub.s32 %s25, 1
      %s31 = ssub.s32 %s25, 2
      %s32 = sadd.s32 %s25, 1
      %s34 = sadd.s32 %s33, 1
      %p37 = scmp.eq.s32.totalorder %s25, 1
      %p38 = scmp.ne.s32.totalorder %s33, %s35
      %p39 = scmp.eq.s32.totalorder %s25, 0
      %p40 = por %p38, %p39
      %p41 = scmp.ne.s32.totalorder %s33, %s35
      %p42 = scmp.eq.s32.totalorder %s30, 1
      %p43 = por %p41, %p42
      %p44 = scmp.ne.s32.totalorder %s35, %s36
      %p45 = scmp.eq.s32.totalorder %s30, 0
      %p46 = por %p44, %p45
      %p47 = scmp.ne.s32.totalorder %s35, %s36
      %p48 = scmp.eq.s32.totalorder %s31, 1
      %p49 = por %p47, %p48
      %p51 = scmp.ne.s32.totalorder %s36, %s50
      %p52 = scmp.eq.s32.totalorder %s31, 0
      %p53 = por %p51, %p52
      %s55 = sadd.s32 %s54, 1
      %p58 = scmp.eq.s32.totalorder %s25, 1
      %p59 = scmp.ne.s32.totalorder %s54, %s56
      %p60 = scmp.eq.s32.totalorder %s25, 0
      %p61 = por %p59, %p60
      %p62 = scmp.ne.s32.totalorder %s54, %s56
      %p63 = scmp.eq.s32.totalorder %s30, 1
      %p64 = por %p62, %p63
      %p65 = scmp.ne.s32.totalorder %s56, %s57
      %p66 = scmp.eq.s32.totalorder %s30, 0
      %p67 = por %p65, %p66
      %p68 = scmp.ne.s32.totalorder %s56, %s57
      %p69 = scmp.eq.s32.totalorder %s31, 1
      %p70 = por %p68, %p69
      %p72 = scmp.ne.s32.totalorder %s57, %s71
      %p73 = scmp.eq.s32.totalorder %s31, 0
      %p74 = por %p72, %p73
      %s76 = sadd.s32 %s75, 1
      %p79 = scmp.eq.s32.totalorder %s25, 1
      %p80 = scmp.ne.s32.totalorder %s75, %s77
      %p81 = scmp.eq.s32.totalorder %s25, 0
      %p82 = por %p80, %p81
      %p83 = scmp.ne.s32.totalorder %s75, %s77
      %p84 = scmp.eq.s32.totalorder %s30, 1
      %p85 = por %p83, %p84
      %p86 = scmp.ne.s32.totalorder %s77, %s78
      %p87 = scmp.eq.s32.totalorder %s30, 0
      %p88 = por %p86, %p87
      %p89 = scmp.ne.s32.totalorder %s77, %s78
      %p90 = scmp.eq.s32.totalorder %s31, 1
      %p91 = por %p89, %p90
      %p93 = scmp.ne.s32.totalorder %s78, %s92
      %p94 = scmp.eq.s32.totalorder %s31, 0
      %p95 = por %p93, %p94
      %s97 = sadd.s32 %s96, 1
      %p100 = scmp.eq.s32.totalorder %s25, 1
      %p101 = scmp.ne.s32.totalorder %s96, %s98
      %p102 = scmp.eq.s32.totalorder %s25, 0
      %p103 = por %p101, %p102
      %p104 = scmp.ne.s32.totalorder %s96, %s98
      %p105 = scmp.eq.s32.totalorder %s30, 1
      %p106 = por %p104, %p105
      %p107 = scmp.ne.s32.totalorder %s98, %s99
      %p108 = scmp.eq.s32.totalorder %s30, 0
      %p109 = por %p107, %p108
      %p110 = scmp.ne.s32.totalorder %s98, %s99
      %p111 = scmp.eq.s32.totalorder %s31, 1
      %p112 = por %p110, %p111
      %p114 = scmp.ne.s32.totalorder %s99, %s113
      %p115 = scmp.eq.s32.totalorder %s31, 0
      %p116 = por %p114, %p115
      %s118 = sadd.s32 %s117, 1
      %p121 = scmp.eq.s32.totalorder %s25, 1
      %p122 = scmp.ne.s32.totalorder %s117, %s119
      %p123 = scmp.eq.s32.totalorder %s25, 0
      %p124 = por %p122, %p123
      %p125 = scmp.ne.s32.totalorder %s117, %s119
      %p126 = scmp.eq.s32.totalorder %s30, 1
      %p127 = por %p125, %p126
      %p128 = scmp.ne.s32.totalorder %s119, %s120
      %p129 = scmp.eq.s32.totalorder %s30, 0
      %p130 = por %p128, %p129
      %p131 = scmp.ne.s32.totalorder %s119, %s120
      %p132 = scmp.eq.s32.totalorder %s31, 1
      %p133 = por %p131, %p132
      %p135 = scmp.ne.s32.totalorder %s120, %s134
      %p136 = scmp.eq.s32.totalorder %s31, 0
      %p137 = por %p135, %p136
      %s139 = sadd.s32 %s138, 1
      %p142 = scmp.eq.s32.totalorder %s25, 1
      %p143 = scmp.ne.s32.totalorder %s138, %s140
      %p144 = scmp.eq.s32.totalorder %s25, 0
      %p145 = por %p143, %p144
      %p146 = scmp.ne.s32.totalorder %s138, %s140
      %p147 = scmp.eq.s32.totalorder %s30, 1
      %p148 = por %p146, %p147
      %p149 = scmp.ne.s32.totalorder %s140, %s141
      %p150 = scmp.eq.s32.totalorder %s30, 0
      %p151 = por %p149, %p150
      %p152 = scmp.ne.s32.totalorder %s140, %s141
      %p153 = scmp.eq.s32.totalorder %s31, 1
      %p154 = por %p152, %p153
      %p156 = scmp.ne.s32.totalorder %s141, %s155
      %p157 = scmp.eq.s32.totalorder %s31, 0
      %p158 = por %p156, %p157
      %s160 = sadd.s32 %s159, 1
      %p163 = scmp.eq.s32.totalorder %s25, 1
      %p164 = scmp.ne.s32.totalorder %s159, %s161
      %p165 = scmp.eq.s32.totalorder %s25, 0
      %p166 = por %p164, %p165
      %p167 = scmp.ne.s32.totalorder %s159, %s161
      %p168 = scmp.eq.s32.totalorder %s30, 1
      %p169 = por %p167, %p168
      %p170 = scmp.ne.s32.totalorder %s161, %s162
      %p171 = scmp.eq.s32.totalorder %s30, 0
      %p172 = por %p170, %p171
      %p173 = scmp.ne.s32.totalorder %s161, %s162
      %p174 = scmp.eq.s32.totalorder %s31, 1
      %p175 = por %p173, %p174
      %p177 = scmp.ne.s32.totalorder %s162, %s176
      %p178 = scmp.eq.s32.totalorder %s31, 0
      %p179 = por %p177, %p178
      %s181 = sadd.s32 %s180, 1
      %p184 = scmp.eq.s32.totalorder %s25, 1
      %p185 = scmp.ne.s32.totalorder %s180, %s182
      %p186 = scmp.eq.s32.totalorder %s25, 0
      %p187 = por %p185, %p186
      %p188 = scmp.ne.s32.totalorder %s180, %s182
      %p189 = scmp.eq.s32.totalorder %s30, 1
      %p190 = por %p188, %p189
      %p191 = scmp.ne.s32.totalorder %s182, %s183
      %p192 = scmp.eq.s32.totalorder %s30, 0
      %p193 = por %p191, %p192
      %p194 = scmp.ne.s32.totalorder %s182, %s183
      %p195 = scmp.eq.s32.totalorder %s31, 1
      %p196 = por %p194, %p195
      %p198 = scmp.ne.s32.totalorder %s183, %s197
      %p199 = scmp.eq.s32.totalorder %s31, 0
      %p200 = por %p198, %p199
      %s202 = sadd.s32 %s201, 1
      %p205 = scmp.eq.s32.totalorder %s25, 1
      %p206 = scmp.ne.s32.totalorder %s201, %s203
      %p207 = scmp.eq.s32.totalorder %s25, 0
      %p208 = por %p206, %p207
      %p209 = scmp.ne.s32.totalorder %s201, %s203
      %p210 = scmp.eq.s32.totalorder %s30, 1
      %p211 = por %p209, %p210
      %p212 = scmp.ne.s32.totalorder %s203, %s204
      %p213 = scmp.eq.s32.totalorder %s30, 0
      %p214 = por %p212, %p213
      %p215 = scmp.ne.s32.totalorder %s203, %s204
      %p216 = scmp.eq.s32.totalorder %s31, 1
      %p217 = por %p215, %p216
      %p219 = scmp.ne.s32.totalorder %s204, %s218
      %p220 = scmp.eq.s32.totalorder %s31, 0
      %p221 = por %p219, %p220
      %s222 = ssub.s32 %s25, %s32
      %p223 = scmp.eq.s32.totalorder %s222, 0
      %s225 = sadd.s32 %s224, 1
      %s226 = scalar_select %p223, %s224, %s225
      %p229 = pneg %p223
      %p230 = scmp.eq.s32.totalorder %s25, 1
      %p231 = por %p229, %p230
      %p232 = scmp.ne.s32.totalorder %s224, %s227
      %p233 = scmp.eq.s32.totalorder %s25, 0
      %p234 = por %p232, %p233
      %p235 = scmp.ne.s32.totalorder %s224, %s227
      %p236 = scmp.eq.s32.totalorder %s30, 1
      %p237 = por %p235, %p236
      %p238 = scmp.ne.s32.totalorder %s227, %s228
      %p239 = scmp.eq.s32.totalorder %s30, 0
      %p240 = por %p238, %p239
      %p241 = scmp.ne.s32.totalorder %s227, %s228
      %p242 = scmp.eq.s32.totalorder %s31, 1
      %p243 = por %p241, %p242
      %p245 = scmp.ne.s32.totalorder %s228, %s244
      %p246 = scmp.eq.s32.totalorder %s31, 0
      %p247 = por %p245, %p246
      %p248 = scmp.le.s32.totalorder 1, %s25
      %p249 = scmp.lt.s32.totalorder %s25, 3
      %p250 = pnand %p248, %p249
      %p251 = pneg %p250
      // Predicated region
      $region9: #{ffnn_lm_forward.1} parent=5 // pred_check
        _
      $region10: #{ffnn_lm_forward.1} parent=5 // pred_check_branch
        %253 = sbr.rel (%p250) target = $region12
      $region11: #{ffnn_lm_forward.1} parent=5 // pred_region
        %s254 = ssub.s32 %s25, 1
        // Predicated region
        $region13: #{ffnn_lm_forward.1} parent=11 // pred_check
          %p255 = pneg %p46
        $region14: #{ffnn_lm_forward.1} parent=11 // pred_check_branch
          %257 = sbr.rel (%p255) target = $region16
        $region15: #{ffnn_lm_forward.1} parent=11 // pred_region
          _
        $region16: #{ffnn_lm_forward.1} parent=11 // pred_fallthru
          _
        // Predicated region
        $region17: #{ffnn_lm_forward.1} parent=11 // pred_check
          %p258 = pneg %p67
        $region18: #{ffnn_lm_forward.1} parent=11 // pred_check_branch
          %260 = sbr.rel (%p258) target = $region20
        $region19: #{ffnn_lm_forward.1} parent=11 // pred_region
          _
        $region20: #{ffnn_lm_forward.1} parent=11 // pred_fallthru
          _
        // Predicated region
        $region21: #{ffnn_lm_forward.1} parent=11 // pred_check
          %p261 = pneg %p88
        $region22: #{ffnn_lm_forward.1} parent=11 // pred_check_branch
          %263 = sbr.rel (%p261) target = $region24
        $region23: #{ffnn_lm_forward.1} parent=11 // pred_region
          _
        $region24: #{ffnn_lm_forward.1} parent=11 // pred_fallthru
          _
        // Predicated region
        $region25: #{ffnn_lm_forward.1} parent=11 // pred_check
          %p264 = pneg %p109
        $region26: #{ffnn_lm_forward.1} parent=11 // pred_check_branch
          %266 = sbr.rel (%p264) target = $region28
        $region27: #{ffnn_lm_forward.1} parent=11 // pred_region
          _
        $region28: #{ffnn_lm_forward.1} parent=11 // pred_fallthru
          _
        // Predicated region
        $region29: #{ffnn_lm_forward.1} parent=11 // pred_check
          %p267 = pneg %p130
        $region30: #{ffnn_lm_forward.1} parent=11 // pred_check_branch
          %269 = sbr.rel (%p267) target = $region32
        $region31: #{ffnn_lm_forward.1} parent=11 // pred_region
          _
        $region32: #{ffnn_lm_forward.1} parent=11 // pred_fallthru
          _
        // Predicated region
        $region33: #{ffnn_lm_forward.1} parent=11 // pred_check
          %p270 = pneg %p151
        $region34: #{ffnn_lm_forward.1} parent=11 // pred_check_branch
          %272 = sbr.rel (%p270) target = $region36
        $region35: #{ffnn_lm_forward.1} parent=11 // pred_region
          _
        $region36: #{ffnn_lm_forward.1} parent=11 // pred_fallthru
          _
        // Predicated region
        $region37: #{ffnn_lm_forward.1} parent=11 // pred_check
          %p273 = pneg %p172
        $region38: #{ffnn_lm_forward.1} parent=11 // pred_check_branch
          %275 = sbr.rel (%p273) target = $region40
        $region39: #{ffnn_lm_forward.1} parent=11 // pred_region
          _
        $region40: #{ffnn_lm_forward.1} parent=11 // pred_fallthru
          _
        // Predicated region
        $region41: #{ffnn_lm_forward.1} parent=11 // pred_check
          %p276 = pneg %p193
        $region42: #{ffnn_lm_forward.1} parent=11 // pred_check_branch
          %278 = sbr.rel (%p276) target = $region44
        $region43: #{ffnn_lm_forward.1} parent=11 // pred_region
          _
        $region44: #{ffnn_lm_forward.1} parent=11 // pred_fallthru
          _
        // Predicated region
        $region45: #{ffnn_lm_forward.1} parent=11 // pred_check
          %p279 = pneg %p214
        $region46: #{ffnn_lm_forward.1} parent=11 // pred_check_branch
          %281 = sbr.rel (%p279) target = $region48
        $region47: #{ffnn_lm_forward.1} parent=11 // pred_region
          _
        $region48: #{ffnn_lm_forward.1} parent=11 // pred_fallthru
          _
      $region12: #{ffnn_lm_forward.1} parent=5 // pred_fallthru
        _
      %p282 = scmp.lt.s32.totalorder %s25, 2
      // Predicated region
      $region49: #{ffnn_lm_forward.1} parent=5 // pred_check
        %p283 = pneg %p282
      $region50: #{ffnn_lm_forward.1} parent=5 // pred_check_branch
        %285 = sbr.rel (%p283) target = $region52
      $region51: #{ffnn_lm_forward.1} parent=5 // pred_region
        _
      $region52: #{ffnn_lm_forward.1} parent=5 // pred_fallthru
        _
      %p286 = scmp.le.s32.totalorder 1, %s25
      %p287 = scmp.lt.s32.totalorder %s25, 3
      %p288 = pnand %p286, %p287
      %p289 = pneg %p288
      // Predicated region
      $region53: #{ffnn_lm_forward.1} parent=5 // pred_check
        _
      $region54: #{ffnn_lm_forward.1} parent=5 // pred_check_branch
        %291 = sbr.rel (%p288) target = $region56
      $region55: #{ffnn_lm_forward.1} parent=5 // pred_region
        %s292 = ssub.s32 %s25, 1
        %p293 = pneg %p46
        %p294 = pneg %p43
        %p295 = pneg %p67
        %p296 = pneg %p64
        %p297 = pneg %p88
        %p298 = pneg %p85
        %p299 = pneg %p109
        %p300 = pneg %p106
        %p301 = pneg %p130
        %p302 = pneg %p127
        %p303 = pneg %p151
        %p304 = pneg %p148
        %p305 = pneg %p172
        %p306 = pneg %p169
        %p307 = pneg %p193
        %p308 = pneg %p190
        %p309 = pneg %p214
        %p310 = pneg %p211
        %p311 = pneg %p240
        %p312 = pneg %p237
        %s313 = sand.u32 %s227, 1
        %s314 = scalar_lea.sflag [#allocation7], %s313
        %s315 = sand.u32 %s227, 1
        %s316 = smul.addr %s315, 8
        %s317 = scalar_lea.vmem [#allocation6], %s316
        %v319 = vld [vmem:[%s1] sm:$0xff]
        %v320 = vld [vmem:[%s1 + $0x8] sm:$0xff]
        %v321 = vld [vmem:[%s1 + $0x10] sm:$0xff]
        %v322 = vld [vmem:[%s1 + $0x18] sm:$0xff]
        %v323 = vld [vmem:[%s1 + $0x20] sm:$0xff]
        %v324 = vld [vmem:[%s1 + $0x28] sm:$0xff]
        %v325 = vld [vmem:[%s1 + $0x30] sm:$0xff]
        %v326 = vld [vmem:[%s1 + $0x38] sm:$0xff]
        %v327 = vld [vmem:[%s1 + $0x40] sm:$0xff]
        %v328 = vld [vmem:[%s1 + $0x48] sm:$0xff]
        %v329 = vld [vmem:[%s1 + $0x50] sm:$0xff]
        %v330 = vld [vmem:[%s1 + $0x58] sm:$0xff]
        %v331 = vld [vmem:[%s1 + $0x60] sm:$0xff]
        %v332 = vld [vmem:[%s1 + $0x68] sm:$0xff]
        %v333 = vld [vmem:[%s1 + $0x70] sm:$0xff]
        %v334 = vld [vmem:[%s1 + $0x78] sm:$0xff]
        %v335 = vld [vmem:[%s2] sm:$0x1]
        %v336 = vld [vmem:[%s3] sm:$0x1]
        %vm337 = vcmask 261120
        %v338 = vsel %vm337, %v319, 0.0
        %339 = vadd.xlane.f32.xlu0 %v338
        %v340 = vpop.xlane.xlu0 %339
        %v341 = vsel %vm337, %v320, 0.0
        %342 = vadd.xlane.f32.xlu0 %v341
        %v343 = vpop.xlane.xlu0 %342
        %v344 = vsel %vm337, %v321, 0.0
        %345 = vadd.xlane.f32.xlu0 %v344
        %v346 = vpop.xlane.xlu0 %345
        %v347 = vsel %vm337, %v322, 0.0
        %348 = vadd.xlane.f32.xlu0 %v347
        %v349 = vpop.xlane.xlu0 %348
        %v350 = vsel %vm337, %v323, 0.0
        %351 = vadd.xlane.f32.xlu0 %v350
        %v352 = vpop.xlane.xlu0 %351
        %v353 = vsel %vm337, %v324, 0.0
        %354 = vadd.xlane.f32.xlu0 %v353
        %v355 = vpop.xlane.xlu0 %354
        %v356 = vsel %vm337, %v325, 0.0
        %357 = vadd.xlane.f32.xlu0 %v356
        %v358 = vpop.xlane.xlu0 %357
        %v359 = vsel %vm337, %v326, 0.0
        %360 = vadd.xlane.f32.xlu0 %v359
        %v361 = vpop.xlane.xlu0 %360
        %v362 = vsel %vm337, %v327, 0.0
        %363 = vadd.xlane.f32.xlu0 %v362
        %v364 = vpop.xlane.xlu0 %363
        %v365 = vsel %vm337, %v328, 0.0
        %366 = vadd.xlane.f32.xlu0 %v365
        %v367 = vpop.xlane.xlu0 %366
        %v368 = vsel %vm337, %v329, 0.0
        %369 = vadd.xlane.f32.xlu0 %v368
        %v370 = vpop.xlane.xlu0 %369
        %v371 = vsel %vm337, %v330, 0.0
        %372 = vadd.xlane.f32.xlu0 %v371
        %v373 = vpop.xlane.xlu0 %372
        %v374 = vsel %vm337, %v331, 0.0
        %375 = vadd.xlane.f32.xlu0 %v374
        %v376 = vpop.xlane.xlu0 %375
        %v377 = vsel %vm337, %v332, 0.0
        %378 = vadd.xlane.f32.xlu0 %v377
        %v379 = vpop.xlane.xlu0 %378
        %v380 = vsel %vm337, %v333, 0.0
        %381 = vadd.xlane.f32.xlu0 %v380
        %v382 = vpop.xlane.xlu0 %381
        %v383 = vsel %vm337, %v334, 0.0
        %384 = vadd.xlane.f32.xlu0 %v383
        %v385 = vpop.xlane.xlu0 %384
        %v386 = vrcp.pop 32.0
        %v387 = vmul.f32 %v340, %v386
        %v388 = vmul.f32 %v343, %v386
        %v389 = vmul.f32 %v346, %v386
        %v390 = vmul.f32 %v349, %v386
        %v391 = vmul.f32 %v352, %v386
        %v392 = vmul.f32 %v355, %v386
        %v393 = vmul.f32 %v358, %v386
        %v394 = vmul.f32 %v361, %v386
        %v395 = vmul.f32 %v364, %v386
        %v396 = vmul.f32 %v367, %v386
        %v397 = vmul.f32 %v370, %v386
        %v398 = vmul.f32 %v373, %v386
        %v399 = vmul.f32 %v376, %v386
        %v400 = vmul.f32 %v379, %v386
        %v401 = vmul.f32 %v382, %v386
        %v402 = vmul.f32 %v385, %v386
        %v403 = vsub.f32 %v319, %v387
        %v404 = vsub.f32 %v320, %v388
        %v405 = vsub.f32 %v321, %v389
        %v406 = vsub.f32 %v322, %v390
        %v407 = vsub.f32 %v323, %v391
        %v408 = vsub.f32 %v324, %v392
        %v409 = vsub.f32 %v325, %v393
        %v410 = vsub.f32 %v326, %v394
        %v411 = vsub.f32 %v327, %v395
        %v412 = vsub.f32 %v328, %v396
        %v413 = vsub.f32 %v329, %v397
        %v414 = vsub.f32 %v330, %v398
        %v415 = vsub.f32 %v331, %v399
        %v416 = vsub.f32 %v332, %v400
        %v417 = vsub.f32 %v333, %v401
        %v418 = vsub.f32 %v334, %v402
        %v419 = vmul.f32 %v403, %v403
        %v420 = vmul.f32 %v404, %v404
        %v421 = vmul.f32 %v405, %v405
        %v422 = vmul.f32 %v406, %v406
        %v423 = vmul.f32 %v407, %v407
        %v424 = vmul.f32 %v408, %v408
        %v425 = vmul.f32 %v409, %v409
        %v426 = vmul.f32 %v410, %v410
        %v427 = vmul.f32 %v411, %v411
        %v428 = vmul.f32 %v412, %v412
        %v429 = vmul.f32 %v413, %v413
        %v430 = vmul.f32 %v414, %v414
        %v431 = vmul.f32 %v415, %v415
        %v432 = vmul.f32 %v416, %v416
        %v433 = vmul.f32 %v417, %v417
        %v434 = vmul.f32 %v418, %v418
        %v435 = vsel %vm337, %v419, 0.0
        %436 = vadd.xlane.f32.xlu0 %v435
        %v437 = vpop.xlane.xlu0 %436
        %v438 = vsel %vm337, %v420, 0.0
        %439 = vadd.xlane.f32.xlu0 %v438
        %v440 = vpop.xlane.xlu0 %439
        %v441 = vsel %vm337, %v421, 0.0
        %442 = vadd.xlane.f32.xlu0 %v441
        %v443 = vpop.xlane.xlu0 %442
        %v444 = vsel %vm337, %v422, 0.0
        %445 = vadd.xlane.f32.xlu0 %v444
        %v446 = vpop.xlane.xlu0 %445
        %v447 = vsel %vm337, %v423, 0.0
        %448 = vadd.xlane.f32.xlu0 %v447
        %v449 = vpop.xlane.xlu0 %448
        %v450 = vsel %vm337, %v424, 0.0
        %451 = vadd.xlane.f32.xlu0 %v450
        %v452 = vpop.xlane.xlu0 %451
        %v453 = vsel %vm337, %v425, 0.0
        %454 = vadd.xlane.f32.xlu0 %v453
        %v455 = vpop.xlane.xlu0 %454
        %v456 = vsel %vm337, %v426, 0.0
        %457 = vadd.xlane.f32.xlu0 %v456
        %v458 = vpop.xlane.xlu0 %457
        %v459 = vsel %vm337, %v427, 0.0
        %460 = vadd.xlane.f32.xlu0 %v459
        %v461 = vpop.xlane.xlu0 %460
        %v462 = vsel %vm337, %v428, 0.0
        %463 = vadd.xlane.f32.xlu0 %v462
        %v464 = vpop.xlane.xlu0 %463
        %v465 = vsel %vm337, %v429, 0.0
        %466 = vadd.xlane.f32.xlu0 %v465
        %v467 = vpop.xlane.xlu0 %466
        %v468 = vsel %vm337, %v430, 0.0
        %469 = vadd.xlane.f32.xlu0 %v468
        %v470 = vpop.xlane.xlu0 %469
        %v471 = vsel %vm337, %v431, 0.0
        %472 = vadd.xlane.f32.xlu0 %v471
        %v473 = vpop.xlane.xlu0 %472
        %v474 = vsel %vm337, %v432, 0.0
        %475 = vadd.xlane.f32.xlu0 %v474
        %v476 = vpop.xlane.xlu0 %475
        %v477 = vsel %vm337, %v433, 0.0
        %478 = vadd.xlane.f32.xlu0 %v477
        %v479 = vpop.xlane.xlu0 %478
        %v480 = vsel %vm337, %v434, 0.0
        %481 = vadd.xlane.f32.xlu0 %v480
        %v482 = vpop.xlane.xlu0 %481
        %v483 = vmul.f32 %v437, %v386
        %v484 = vmul.f32 %v440, %v386
        %v485 = vmul.f32 %v443, %v386
        %v486 = vmul.f32 %v446, %v386
        %v487 = vmul.f32 %v449, %v386
        %v488 = vmul.f32 %v452, %v386
        %v489 = vmul.f32 %v455, %v386
        %v490 = vmul.f32 %v458, %v386
        %v491 = vmul.f32 %v461, %v386
        %v492 = vmul.f32 %v464, %v386
        %v493 = vmul.f32 %v467, %v386
        %v494 = vmul.f32 %v470, %v386
        %v495 = vmul.f32 %v473, %v386
        %v496 = vmul.f32 %v476, %v386
        %v497 = vmul.f32 %v479, %v386
        %v498 = vmul.f32 %v482, %v386
        %v499 = vadd.f32 %v483, 1e-05
        %v500 = vadd.f32 %v484, 1e-05
        %v501 = vadd.f32 %v485, 1e-05
        %v502 = vadd.f32 %v486, 1e-05
        %v503 = vadd.f32 %v487, 1e-05
        %v504 = vadd.f32 %v488, 1e-05
        %v505 = vadd.f32 %v489, 1e-05
        %v506 = vadd.f32 %v490, 1e-05
        %v507 = vadd.f32 %v491, 1e-05
        %v508 = vadd.f32 %v492, 1e-05
        %v509 = vadd.f32 %v493, 1e-05
        %v510 = vadd.f32 %v494, 1e-05
        %v511 = vadd.f32 %v495, 1e-05
        %v512 = vadd.f32 %v496, 1e-05
        %v513 = vadd.f32 %v497, 1e-05
        %v514 = vadd.f32 %v498, 1e-05
        %v515 = vrsqrt.pop %v499
        %v516 = vrsqrt.pop %v500
        %v517 = vrsqrt.pop %v501
        %v518 = vrsqrt.pop %v502
        %v519 = vrsqrt.pop %v503
        %v520 = vrsqrt.pop %v504
        %v521 = vrsqrt.pop %v505
        %v522 = vrsqrt.pop %v506
        %v523 = vrsqrt.pop %v507
        %v524 = vrsqrt.pop %v508
        %v525 = vrsqrt.pop %v509
        %v526 = vrsqrt.pop %v510
        %v527 = vrsqrt.pop %v511
        %v528 = vrsqrt.pop %v512
        %v529 = vrsqrt.pop %v513
        %v530 = vrsqrt.pop %v514
        %v531 = vmul.f32 %v403, %v515
        %v532 = vmul.f32 %v404, %v516
        %v533 = vmul.f32 %v405, %v517
        %v534 = vmul.f32 %v406, %v518
        %v535 = vmul.f32 %v407, %v519
        %v536 = vmul.f32 %v408, %v520
        %v537 = vmul.f32 %v409, %v521
        %v538 = vmul.f32 %v410, %v522
        %v539 = vmul.f32 %v411, %v523
        %v540 = vmul.f32 %v412, %v524
        %v541 = vmul.f32 %v413, %v525
        %v542 = vmul.f32 %v414, %v526
        %v543 = vmul.f32 %v415, %v527
        %v544 = vmul.f32 %v416, %v528
        %v545 = vmul.f32 %v417, %v529
        %v546 = vmul.f32 %v418, %v530
        %v548 = vlaneseq
        %v549 = vshrl.u32 %v548, 7
        %v550 = vsub.s32 0, %v549
        %v551 = vrot.slane %v335, %v550
        %v553 = vmul.f32 %v531, %v551
        %v554 = vmul.f32 %v532, %v551
        %v555 = vmul.f32 %v533, %v551
        %v556 = vmul.f32 %v534, %v551
        %v557 = vmul.f32 %v535, %v551
        %v558 = vmul.f32 %v536, %v551
        %v559 = vmul.f32 %v537, %v551
        %v560 = vmul.f32 %v538, %v551
        %v561 = vmul.f32 %v539, %v551
        %v562 = vmul.f32 %v540, %v551
        %v563 = vmul.f32 %v541, %v551
        %v564 = vmul.f32 %v542, %v551
        %v565 = vmul.f32 %v543, %v551
        %v566 = vmul.f32 %v544, %v551
        %v567 = vmul.f32 %v545, %v551
        %v568 = vmul.f32 %v546, %v551
        %v570 = vlaneseq
        %v571 = vshrl.u32 %v570, 7
        %v572 = vsub.s32 0, %v571
        %v573 = vrot.slane %v336, %v572
        %v575 = vadd.f32 %v553, %v573
        %v576 = vadd.f32 %v554, %v573
        %v577 = vadd.f32 %v555, %v573
        %v578 = vadd.f32 %v556, %v573
        %v579 = vadd.f32 %v557, %v573
        %v580 = vadd.f32 %v558, %v573
        %v581 = vadd.f32 %v559, %v573
        %v582 = vadd.f32 %v560, %v573
        %v583 = vadd.f32 %v561, %v573
        %v584 = vadd.f32 %v562, %v573
        %v585 = vadd.f32 %v563, %v573
        %v586 = vadd.f32 %v564, %v573
        %v587 = vadd.f32 %v565, %v573
        %v588 = vadd.f32 %v566, %v573
        %v589 = vadd.f32 %v567, %v573
        %v590 = vadd.f32 %v568, %v573
        %591 = vst.msk [vmem:[#allocation2] sm:$0xff] %vm337, %v575
        %592 = vst.msk [vmem:[#allocation2 + $0x8] sm:$0xff] %vm337, %v576
        %593 = vst.msk [vmem:[#allocation2 + $0x10] sm:$0xff] %vm337, %v577
        %594 = vst.msk [vmem:[#allocation2 + $0x18] sm:$0xff] %vm337, %v578
        %595 = vst.msk [vmem:[#allocation2 + $0x20] sm:$0xff] %vm337, %v579
        %596 = vst.msk [vmem:[#allocation2 + $0x28] sm:$0xff] %vm337, %v580
        %597 = vst.msk [vmem:[#allocation2 + $0x30] sm:$0xff] %vm337, %v581
        %598 = vst.msk [vmem:[#allocation2 + $0x38] sm:$0xff] %vm337, %v582
        %599 = vst.msk [vmem:[#allocation2 + $0x40] sm:$0xff] %vm337, %v583
        %600 = vst.msk [vmem:[#allocation2 + $0x48] sm:$0xff] %vm337, %v584
        %601 = vst.msk [vmem:[#allocation2 + $0x50] sm:$0xff] %vm337, %v585
        %602 = vst.msk [vmem:[#allocation2 + $0x58] sm:$0xff] %vm337, %v586
        %603 = vst.msk [vmem:[#allocation2 + $0x60] sm:$0xff] %vm337, %v587
        %604 = vst.msk [vmem:[#allocation2 + $0x68] sm:$0xff] %vm337, %v588
        %605 = vst.msk [vmem:[#allocation2 + $0x70] sm:$0xff] %vm337, %v589
        %606 = vst.msk [vmem:[#allocation2 + $0x78] sm:$0xff] %vm337, %v590
        %s607 = smul.u32 %s30, 8
        %s608 = smul.u32 %s607, 128
        %s609 = sld [smem:[#allocation5 + %s608]]
        %s610 = scalar_lea.vmem [#allocation2], %s609
        %v611 = vld [vmem:[%s610] sm:$0x1]
        %vm612 = vcmask 253952
        %613 = vst.msk [vmem:[#allocation3] sm:$0x1] %vm612, %v611
        %s614 = sadd.s32 %s608, 1
        %s615 = sld [smem:[#allocation5 + %s614]]
        %s616 = scalar_lea.vmem [#allocation2], %s615
        %v617 = vld [vmem:[%s616] sm:$0x1]
        %619 = vrot.lane.b32.xlu0 %v617, 32
        %v620 = vpop.permute.xlu0 %619
        %vm622 = vcmask 516352
        %623 = vst.msk [vmem:[#allocation3] sm:$0x1] %vm622, %v620
        %s624 = sadd.s32 %s608, 2
        %s625 = sld [smem:[#allocation5 + %s624]]
        %s626 = scalar_lea.vmem [#allocation2], %s625
        %v627 = vld [vmem:[%s626] sm:$0x1]
        %629 = vrot.lane.b32.xlu0 %v627, 64
        %v630 = vpop.permute.xlu0 %629
        %vm632 = vcmask 778752
        %633 = vst.msk [vmem:[#allocation3] sm:$0x1] %vm632, %v630
        %s634 = sadd.s32 %s608, 3
        %s635 = sld [smem:[#allocation5 + %s634]]
        %s636 = scalar_lea.vmem [#allocation2], %s635
        %v637 = vld [vmem:[%s636] sm:$0x1]
        %639 = vrot.lane.b32.xlu0 %v637, 96
        %v640 = vpop.permute.xlu0 %639
        %vm642 = vcmask 1041152
        %643 = vst.msk [vmem:[#allocation3] sm:$0x1] %vm642, %v640
        %s644 = sadd.s32 %s607, 1
        %s645 = smul.u32 %s644, 128
        %s646 = sld [smem:[#allocation5 + %s645]]
        %s647 = scalar_lea.vmem [#allocation2], %s646
        %v648 = vld [vmem:[%s647] sm:$0x1]
        %649 = vst.msk [vmem:[#allocation3 + $0x1] sm:$0x1] %vm612, %v648
        %s650 = sadd.s32 %s645, 1
        %s651 = sld [smem:[#allocation5 + %s650]]
        %s652 = scalar_lea.vmem [#allocation2], %s651
        %v653 = vld [vmem:[%s652] sm:$0x1]
        %655 = vrot.lane.b32.xlu0 %v653, 32
        %v656 = vpop.permute.xlu0 %655
        %658 = vst.msk [vmem:[#allocation3 + $0x1] sm:$0x1] %vm622, %v656
        %s659 = sadd.s32 %s645, 2
        %s660 = sld [smem:[#allocation5 + %s659]]
        %s661 = scalar_lea.vmem [#allocation2], %s660
        %v662 = vld [vmem:[%s661] sm:$0x1]
        %664 = vrot.lane.b32.xlu0 %v662, 64
        %v665 = vpop.permute.xlu0 %664
        %667 = vst.msk [vmem:[#allocation3 + $0x1] sm:$0x1] %vm632, %v665
        %s668 = sadd.s32 %s645, 3
        %s669 = sld [smem:[#allocation5 + %s668]]
        %s670 = scalar_lea.vmem [#allocation2], %s669
        %v671 = vld [vmem:[%s670] sm:$0x1]
        %673 = vrot.lane.b32.xlu0 %v671, 96
        %v674 = vpop.permute.xlu0 %673
        %676 = vst.msk [vmem:[#allocation3 + $0x1] sm:$0x1] %vm642, %v674
        %s677 = sadd.s32 %s607, 2
        %s678 = smul.u32 %s677, 128
        %s679 = sld [smem:[#allocation5 + %s678]]
        %s680 = scalar_lea.vmem [#allocation2], %s679
        %v681 = vld [vmem:[%s680] sm:$0x1]
        %682 = vst.msk [vmem:[#allocation3 + $0x2] sm:$0x1] %vm612, %v681
        %s683 = sadd.s32 %s678, 1
        %s684 = sld [smem:[#allocation5 + %s683]]
        %s685 = scalar_lea.vmem [#allocation2], %s684
        %v686 = vld [vmem:[%s685] sm:$0x1]
        %688 = vrot.lane.b32.xlu0 %v686, 32
        %v689 = vpop.permute.xlu0 %688
        %691 = vst.msk [vmem:[#allocation3 + $0x2] sm:$0x1] %vm622, %v689
        %s692 = sadd.s32 %s678, 2
        %s693 = sld [smem:[#allocation5 + %s692]]
        %s694 = scalar_lea.vmem [#allocation2], %s693
        %v695 = vld [vmem:[%s694] sm:$0x1]
        %697 = vrot.lane.b32.xlu0 %v695, 64
        %v698 = vpop.permute.xlu0 %697
        %700 = vst.msk [vmem:[#allocation3 + $0x2] sm:$0x1] %vm632, %v698
        %s701 = sadd.s32 %s678, 3
        %s702 = sld [smem:[#allocation5 + %s701]]
        %s703 = scalar_lea.vmem [#allocation2], %s702
        %v704 = vld [vmem:[%s703] sm:$0x1]
        %706 = vrot.lane.b32.xlu0 %v704, 96
        %v707 = vpop.permute.xlu0 %706
        %709 = vst.msk [vmem:[#allocation3 + $0x2] sm:$0x1] %vm642, %v707
        %s710 = sadd.s32 %s607, 3
        %s711 = smul.u32 %s710, 128
        %s712 = sld [smem:[#allocation5 + %s711]]
        %s713 = scalar_lea.vmem [#allocation2], %s712
        %v714 = vld [vmem:[%s713] sm:$0x1]
        %715 = vst.msk [vmem:[#allocation3 + $0x3] sm:$0x1] %vm612, %v714
        %s716 = sadd.s32 %s711, 1
        %s717 = sld [smem:[#allocation5 + %s716]]
        %s718 = scalar_lea.vmem [#allocation2], %s717
        %v719 = vld [vmem:[%s718] sm:$0x1]
        %721 = vrot.lane.b32.xlu0 %v719, 32
        %v722 = vpop.permute.xlu0 %721
        %724 = vst.msk [vmem:[#allocation3 + $0x3] sm:$0x1] %vm622, %v722
        %s725 = sadd.s32 %s711, 2
        %s726 = sld [smem:[#allocation5 + %s725]]
        %s727 = scalar_lea.vmem [#allocation2], %s726
        %v728 = vld [vmem:[%s727] sm:$0x1]
        %730 = vrot.lane.b32.xlu0 %v728, 64
        %v731 = vpop.permute.xlu0 %730
        %733 = vst.msk [vmem:[#allocation3 + $0x3] sm:$0x1] %vm632, %v731
        %s734 = sadd.s32 %s711, 3
        %s735 = sld [smem:[#allocation5 + %s734]]
        %s736 = scalar_lea.vmem [#allocation2], %s735
        %v737 = vld [vmem:[%s736] sm:$0x1]
        %739 = vrot.lane.b32.xlu0 %v737, 96
        %v740 = vpop.permute.xlu0 %739
        %742 = vst.msk [vmem:[#allocation3 + $0x3] sm:$0x1] %vm642, %v740
        %s743 = sadd.s32 %s607, 4
        %s744 = smul.u32 %s743, 128
        %s745 = sld [smem:[#allocation5 + %s744]]
        %s746 = scalar_lea.vmem [#allocation2], %s745
        %v747 = vld [vmem:[%s746] sm:$0x1]
        %748 = vst.msk [vmem:[#allocation3 + $0x4] sm:$0x1] %vm612, %v747
        %s749 = sadd.s32 %s744, 1
        %s750 = sld [smem:[#allocation5 + %s749]]
        %s751 = scalar_lea.vmem [#allocation2], %s750
        %v752 = vld [vmem:[%s751] sm:$0x1]
        %754 = vrot.lane.b32.xlu0 %v752, 32
        %v755 = vpop.permute.xlu0 %754
        %757 = vst.msk [vmem:[#allocation3 + $0x4] sm:$0x1] %vm622, %v755
        %s758 = sadd.s32 %s744, 2
        %s759 = sld [smem:[#allocation5 + %s758]]
        %s760 = scalar_lea.vmem [#allocation2], %s759
        %v761 = vld [vmem:[%s760] sm:$0x1]
        %763 = vrot.lane.b32.xlu0 %v761, 64
        %v764 = vpop.permute.xlu0 %763
        %766 = vst.msk [vmem:[#allocation3 + $0x4] sm:$0x1] %vm632, %v764
        %s767 = sadd.s32 %s744, 3
        %s768 = sld [smem:[#allocation5 + %s767]]
        %s769 = scalar_lea.vmem [#allocation2], %s768
        %v770 = vld [vmem:[%s769] sm:$0x1]
        %772 = vrot.lane.b32.xlu0 %v770, 96
        %v773 = vpop.permute.xlu0 %772
        %775 = vst.msk [vmem:[#allocation3 + $0x4] sm:$0x1] %vm642, %v773
        %s776 = sadd.s32 %s607, 5
        %s777 = smul.u32 %s776, 128
        %s778 = sld [smem:[#allocation5 + %s777]]
        %s779 = scalar_lea.vmem [#allocation2], %s778
        %v780 = vld [vmem:[%s779] sm:$0x1]
        %781 = vst.msk [vmem:[#allocation3 + $0x5] sm:$0x1] %vm612, %v780
        %s782 = sadd.s32 %s777, 1
        %s783 = sld [smem:[#allocation5 + %s782]]
        %s784 = scalar_lea.vmem [#allocation2], %s783
        %v785 = vld [vmem:[%s784] sm:$0x1]
        %787 = vrot.lane.b32.xlu0 %v785, 32
        %v788 = vpop.permute.xlu0 %787
        %790 = vst.msk [vmem:[#allocation3 + $0x5] sm:$0x1] %vm622, %v788
        %s791 = sadd.s32 %s777, 2
        %s792 = sld [smem:[#allocation5 + %s791]]
        %s793 = scalar_lea.vmem [#allocation2], %s792
        %v794 = vld [vmem:[%s793] sm:$0x1]
        %796 = vrot.lane.b32.xlu0 %v794, 64
        %v797 = vpop.permute.xlu0 %796
        %799 = vst.msk [vmem:[#allocation3 + $0x5] sm:$0x1] %vm632, %v797
        %s800 = sadd.s32 %s777, 3
        %s801 = sld [smem:[#allocation5 + %s800]]
        %s802 = scalar_lea.vmem [#allocation2], %s801
        %v803 = vld [vmem:[%s802] sm:$0x1]
        %805 = vrot.lane.b32.xlu0 %v803, 96
        %v806 = vpop.permute.xlu0 %805
        %808 = vst.msk [vmem:[#allocation3 + $0x5] sm:$0x1] %vm642, %v806
        %s809 = sadd.s32 %s607, 6
        %s810 = smul.u32 %s809, 128
        %s811 = sld [smem:[#allocation5 + %s810]]
        %s812 = scalar_lea.vmem [#allocation2], %s811
        %v813 = vld [vmem:[%s812] sm:$0x1]
        %814 = vst.msk [vmem:[#allocation3 + $0x6] sm:$0x1] %vm612, %v813
        %s815 = sadd.s32 %s810, 1
        %s816 = sld [smem:[#allocation5 + %s815]]
        %s817 = scalar_lea.vmem [#allocation2], %s816
        %v818 = vld [vmem:[%s817] sm:$0x1]
        %820 = vrot.lane.b32.xlu0 %v818, 32
        %v821 = vpop.permute.xlu0 %820
        %823 = vst.msk [vmem:[#allocation3 + $0x6] sm:$0x1] %vm622, %v821
        %s824 = sadd.s32 %s810, 2
        %s825 = sld [smem:[#allocation5 + %s824]]
        %s826 = scalar_lea.vmem [#allocation2], %s825
        %v827 = vld [vmem:[%s826] sm:$0x1]
        %829 = vrot.lane.b32.xlu0 %v827, 64
        %v830 = vpop.permute.xlu0 %829
        %832 = vst.msk [vmem:[#allocation3 + $0x6] sm:$0x1] %vm632, %v830
        %s833 = sadd.s32 %s810, 3
        %s834 = sld [smem:[#allocation5 + %s833]]
        %s835 = scalar_lea.vmem [#allocation2], %s834
        %v836 = vld [vmem:[%s835] sm:$0x1]
        %838 = vrot.lane.b32.xlu0 %v836, 96
        %v839 = vpop.permute.xlu0 %838
        %841 = vst.msk [vmem:[#allocation3 + $0x6] sm:$0x1] %vm642, %v839
        %s842 = sadd.s32 %s607, 7
        %s843 = smul.u32 %s842, 128
        %s844 = sld [smem:[#allocation5 + %s843]]
        %s845 = scalar_lea.vmem [#allocation2], %s844
        %v846 = vld [vmem:[%s845] sm:$0x1]
        %847 = vst.msk [vmem:[#allocation3 + $0x7] sm:$0x1] %vm612, %v846
        %s848 = sadd.s32 %s843, 1
        %s849 = sld [smem:[#allocation5 + %s848]]
        %s850 = scalar_lea.vmem [#allocation2], %s849
        %v851 = vld [vmem:[%s850] sm:$0x1]
        %853 = vrot.lane.b32.xlu0 %v851, 32
        %v854 = vpop.permute.xlu0 %853
        %856 = vst.msk [vmem:[#allocation3 + $0x7] sm:$0x1] %vm622, %v854
        %s857 = sadd.s32 %s843, 2
        %s858 = sld [smem:[#allocation5 + %s857]]
        %s859 = scalar_lea.vmem [#allocation2], %s858
        %v860 = vld [vmem:[%s859] sm:$0x1]
        %862 = vrot.lane.b32.xlu0 %v860, 64
        %v863 = vpop.permute.xlu0 %862
        %865 = vst.msk [vmem:[#allocation3 + $0x7] sm:$0x1] %vm632, %v863
        %s866 = sadd.s32 %s843, 3
        %s867 = sld [smem:[#allocation5 + %s866]]
        %s868 = scalar_lea.vmem [#allocation2], %s867
        %v869 = vld [vmem:[%s868] sm:$0x1]
        %871 = vrot.lane.b32.xlu0 %v869, 96
        %v872 = vpop.permute.xlu0 %871
        %874 = vst.msk [vmem:[#allocation3 + $0x7] sm:$0x1] %vm642, %v872
        %v875 = vld [vmem:[#allocation3] sm:$0xff]
        %v876 = vpack.c.bf16 %v875, %v875
        %v877 = vld [vmem:[%s4] sm:$0xf]
        %v878 = vld [vmem:[%s4 + $0x4] sm:$0xf]
        %v879 = vld [vmem:[%s4 + $0x8] sm:$0xf]
        %v880 = vld [vmem:[%s4 + $0xc] sm:$0xf]
        %v881 = vld [vmem:[%s4 + $0x10] sm:$0xf]
        %v882 = vld [vmem:[%s4 + $0x14] sm:$0xf]
        %v883 = vld [vmem:[%s4 + $0x18] sm:$0xf]
        %v884 = vld [vmem:[%s4 + $0x1c] sm:$0xf]
        %v885 = vld [vmem:[%s4 + $0x20] sm:$0xf]
        %v886 = vld [vmem:[%s4 + $0x24] sm:$0xf]
        %v887 = vld [vmem:[%s4 + $0x28] sm:$0xf]
        %v888 = vld [vmem:[%s4 + $0x2c] sm:$0xf]
        %v889 = vld [vmem:[%s4 + $0x30] sm:$0xf]
        %v890 = vld [vmem:[%s4 + $0x34] sm:$0xf]
        %v891 = vld [vmem:[%s4 + $0x38] sm:$0xf]
        %v892 = vld [vmem:[%s4 + $0x3c] sm:$0xf]
        %v893 = vld [vmem:[%s5] sm:$0x1]
        %v895 = vlaneseq
        %v896 = vshrl.u32 %v895, 7
        %v897 = vsub.s32 0, %v896
        %v898 = vrot.slane %v893, %v897
        %v916 = vunpack.c.l.b16 %v877
        %v917 = vunpack.c.l.b16 %v878
        %v918 = vunpack.c.l.b16 %v879
        %v919 = vunpack.c.l.b16 %v880
        %v920 = vunpack.c.l.b16 %v881
        %v921 = vunpack.c.l.b16 %v882
        %v922 = vunpack.c.l.b16 %v883
        %v923 = vunpack.c.l.b16 %v884
        %v924 = vunpack.c.l.b16 %v885
        %v925 = vunpack.c.l.b16 %v886
        %v926 = vunpack.c.l.b16 %v887
        %v927 = vunpack.c.l.b16 %v888
        %v928 = vunpack.c.l.b16 %v889
        %v929 = vunpack.c.l.b16 %v890
        %v930 = vunpack.c.l.b16 %v891
        %v931 = vunpack.c.l.b16 %v892
        %v932 = vpack.c.b16 %v917, %v916
        %v933 = vpack.c.b16 %v919, %v918
        %v934 = vpack.c.b16 %v921, %v920
        %v935 = vpack.c.b16 %v923, %v922
        %v936 = vpack.c.b16 %v925, %v924
        %v937 = vpack.c.b16 %v927, %v926
        %v938 = vpack.c.b16 %v929, %v928
        %v939 = vpack.c.b16 %v931, %v930
        %948 = vmatprep.subr.bf16.mxu0 0
        %949 = vmatpush1.bf16.msra.mxu0 %v932
        %950 = vmatprep.subr.bf16.mxu0 0
        %951 = vmatpush1.bf16.msra.mxu0 %v933
        %952 = vmatprep.subr.bf16.mxu0 0
        %953 = vmatpush1.bf16.msra.mxu0 %v934
        %954 = vmatprep.subr.bf16.mxu0 0
        %955 = vmatpush1.bf16.msra.mxu0 %v935
        %956 = vmatprep.subr.bf16.mxu0 0
        %957 = vmatpush1.bf16.msra.mxu0 %v936
        %958 = vmatprep.subr.bf16.mxu0 0
        %959 = vmatpush1.bf16.msra.mxu0 %v937
        %960 = vmatprep.subr.bf16.mxu0 0
        %961 = vmatpush1.bf16.msra.mxu0 %v938
        %962 = vmatprep.subr.bf16.mxu0 0
        %963 = vmatpush1.bf16.msra.mxu0 %v939
        %964 = vmatprep.subr.bf16.mxu0 0
        %965 = vmatpush1.bf16.msra.mxu0 0
        %966 = vmatprep.subr.bf16.mxu0 0
        %967 = vmatpush1.bf16.msra.mxu0 0
        %968 = vmatprep.subr.bf16.mxu0 0
        %969 = vmatpush1.bf16.msra.mxu0 0
        %970 = vmatprep.subr.bf16.mxu0 0
        %971 = vmatpush1.bf16.msra.mxu0 0
        %972 = vmatprep.subr.bf16.mxu0 0
        %973 = vmatpush1.bf16.msra.mxu0 0
        %974 = vmatprep.subr.bf16.mxu0 0
        %975 = vmatpush1.bf16.msra.mxu0 0
        %976 = vmatprep.subr.bf16.mxu0 0
        %977 = vmatpush1.bf16.msra.mxu0 0
        %978 = vmatprep.subr.bf16.mxu0 0
        %979 = vmatpush1.bf16.msra.mxu0 0
        %980 = vmatprep.mubr.bf16.mxu0 0
        %981 = vmatmul.mubr.bf16.gmra.mrb[0].mxu0 %v876
        %v982 = vpop.f32.mrb[0].mxu0
        %v983 = vadd.f32 %v898, %v982
        %v984 = vpop.f32.mrb[0].mxu0
        %v985 = vpop.f32.mrb[0].mxu0
        %v986 = vpop.f32.mrb[0].mxu0
        %987 = vdwg.mxu0
        %v988 = vld [vmem:[%s6] sm:$0x1]
        %v989 = vld [vmem:[%s7] sm:$0x1]
        %v990 = vsel %vm337, %v983, 0.0
        %991 = vadd.xlane.f32.xlu0 %v990
        %v992 = vpop.xlane.xlu0 %991
        %v993 = vmul.f32 %v992, %v386
        %v994 = vsub.f32 %v983, %v993
        %v995 = vmul.f32 %v994, %v994
        %v996 = vsel %vm337, %v995, 0.0
        %997 = vadd.xlane.f32.xlu0 %v996
        %v998 = vpop.xlane.xlu0 %997
        %v999 = vmul.f32 %v998, %v386
        %v1000 = vadd.f32 %v999, 1e-05
        %v1001 = vrsqrt.pop %v1000
        %v1002 = vmul.f32 %v994, %v1001
        %v1004 = vlaneseq
        %v1005 = vshrl.u32 %v1004, 7
        %v1006 = vsub.s32 0, %v1005
        %v1007 = vrot.slane %v988, %v1006
        %v1009 = vmul.f32 %v1002, %v1007
        %v1011 = vlaneseq
        %v1012 = vshrl.u32 %v1011, 7
        %v1013 = vsub.s32 0, %v1012
        %v1014 = vrot.slane %v989, %v1013
        %v1016 = vadd.f32 %v1009, %v1014
        %v1017 = vmax.f32 %v1016, 0.0
        %v1018 = vpack.c.bf16 %v1017, %v1017
        %v1019 = vld [vmem:[%s8] sm:$0xf]
        %v1020 = vld [vmem:[%s8 + $0x4] sm:$0xf]
        %v1021 = vld [vmem:[%s8 + $0x8] sm:$0xf]
        %v1022 = vld [vmem:[%s8 + $0xc] sm:$0xf]
        %v1023 = vld [vmem:[%s9] sm:$0x1]
        %v1025 = vlaneseq
        %v1026 = vshrl.u32 %v1025, 7
        %v1027 = vsub.s32 0, %v1026
        %v1028 = vrot.slane %v1023, %v1027
        %v1034 = vunpack.c.l.b16 %v1019
        %v1035 = vunpack.c.l.b16 %v1020
        %v1036 = vunpack.c.l.b16 %v1021
        %v1037 = vunpack.c.l.b16 %v1022
        %v1038 = vpack.c.b16 %v1035, %v1034
        %v1039 = vpack.c.b16 %v1037, %v1036
        %v1043 = vsel %vm337, %v1018, 0
        %1045 = vmatprep.subr.bf16.mxu0 0
        %1046 = vmatpush1.bf16.msra.mxu0 %v1038
        %1047 = vmatprep.subr.bf16.mxu0 0
        %1048 = vmatpush1.bf16.msra.mxu0 %v1039
        %1049 = vmatprep.subr.bf16.mxu0 0
        %1050 = vmatpush1.bf16.msra.mxu0 0
        %1051 = vmatprep.subr.bf16.mxu0 0
        %1052 = vmatpush1.bf16.msra.mxu0 0
        %1053 = vmatprep.subr.bf16.mxu0 0
        %1054 = vmatpush1.bf16.msra.mxu0 0
        %1055 = vmatprep.subr.bf16.mxu0 0
        %1056 = vmatpush1.bf16.msra.mxu0 0
        %1057 = vmatprep.subr.bf16.mxu0 0
        %1058 = vmatpush1.bf16.msra.mxu0 0
        %1059 = vmatprep.subr.bf16.mxu0 0
        %1060 = vmatpush1.bf16.msra.mxu0 0
        %1061 = vmatprep.subr.bf16.mxu0 0
        %1062 = vmatpush1.bf16.msra.mxu0 0
        %1063 = vmatprep.subr.bf16.mxu0 0
        %1064 = vmatpush1.bf16.msra.mxu0 0
        %1065 = vmatprep.subr.bf16.mxu0 0
        %1066 = vmatpush1.bf16.msra.mxu0 0
        %1067 = vmatprep.subr.bf16.mxu0 0
        %1068 = vmatpush1.bf16.msra.mxu0 0
        %1069 = vmatprep.subr.bf16.mxu0 0
        %1070 = vmatpush1.bf16.msra.mxu0 0
        %1071 = vmatprep.subr.bf16.mxu0 0
        %1072 = vmatpush1.bf16.msra.mxu0 0
        %1073 = vmatprep.subr.bf16.mxu0 0
        %1074 = vmatpush1.bf16.msra.mxu0 0
        %1075 = vmatprep.subr.bf16.mxu0 0
        %1076 = vmatpush1.bf16.msra.mxu0 0
        %1077 = vmatprep.mubr.bf16.mxu0 0
        %1078 = vmatmul.mubr.bf16.gmra.mrb[0].mxu0 %v1043
        %v1079 = vpop.f32.mrb[0].mxu0
        %v1080 = vadd.f32 %v1028, %v1079
        %v1081 = vpop.f32.mrb[0].mxu0
        %v1082 = vpop.f32.mrb[0].mxu0
        %v1083 = vpop.f32.mrb[0].mxu0
        %1084 = vdwg.mxu0
        %1085 = vmax.xlane.f32.xlu0 %v1080
        %v1086 = vpop.xlane.xlu0 %1085
        %v1087 = vsub.f32 %v1080, %v1086
        %v1088 = vmul.f32 %v1087, 1.442695
        %v1089 = vpow.pop %v1088
        %1090 = vadd.xlane.f32.xlu0 %v1089
        %v1091 = vpop.xlane.xlu0 %1090
        %v1092 = vlog2.pop %v1091
        %v1093 = vmul.f32 %v1092, 0.6931472
        %v1094 = vadd.f32 %v1086, %v1093
        %v1095 = vsub.f32 %v1080, %v1094
        %1096 = vst [vmem:[%s317] sm:$0xff] %v1095
        %s1097 = sand.u32 %s227, 1
        %s1098 = scalar_lea.sflag [#allocation7], %s1097
        %s1099 = sand.u32 %s227, 1
        %s1100 = smul.addr %s1099, 8
        %s1101 = scalar_lea.vmem [#allocation6], %s1100
        // Predicated region
        $region57: #{ffnn_lm_forward.1} parent=55 // pred_check
          %p1102 = pneg %p237
        $region58: #{ffnn_lm_forward.1} parent=55 // pred_check_branch
          %1104 = sbr.rel (%p1102) target = $region60
        $region59: #{ffnn_lm_forward.1} parent=55 // pred_region
          %s1106 = ssub.s32 128, 128
          %1107 = vsyncadd %s1098, %s1106
          %s1108 = smul.addr %s30, 128
          %s1109 = scalar_lea.hbm %s10, %s1108
          %s1111 = sshll.u32 %s1101, 4
          %s1112 = int_to_ptr.vmem [resolvable:$true] %s1111
          %1114 = dma.vmem_to_hbm [thread:$0]  %s1112, 128, %s1109, %s1098
        $region60: #{ffnn_lm_forward.1} parent=55 // pred_fallthru
          _
      $region56: #{ffnn_lm_forward.1} parent=5 // pred_fallthru
        _
      %p1115 = scmp.le.s32.totalorder 2, %s25
      // Predicated region
      $region61: #{ffnn_lm_forward.1} parent=5 // pred_check
        %p1116 = pneg %p1115
      $region62: #{ffnn_lm_forward.1} parent=5 // pred_check_branch
        %1118 = sbr.rel (%p1116) target = $region64
      $region63: #{ffnn_lm_forward.1} parent=5 // pred_region
        %s1119 = ssub.s32 %s25, 2
        // Predicated region
        $region65: #{ffnn_lm_forward.1} parent=63 // pred_check
          %p1120 = pneg %p243
        $region66: #{ffnn_lm_forward.1} parent=63 // pred_check_branch
          %1122 = sbr.rel (%p1120) target = $region68
        $region67: #{ffnn_lm_forward.1} parent=63 // pred_region
          %s1123 = sand.u32 %s228, 1
          %s1124 = scalar_lea.sflag [#allocation7], %s1123
          %s1125 = sand.u32 %s228, 1
          %s1126 = smul.addr %s1125, 8
          %s1127 = scalar_lea.vmem [#allocation6], %s1126
          %1128 = dma.done %s1124, 128
        $region68: #{ffnn_lm_forward.1} parent=63 // pred_fallthru
          _
      $region64: #{ffnn_lm_forward.1} parent=5 // pred_fallthru
        _
    $region6: #{ffnn_lm_forward.1} parent=1 // loop_footer
      %s29 = sadd.s32 1, %s25
    $region7: #{ffnn_lm_forward.1} parent=1 // loop_footer_branch
      %24 = sbr.rel target = $region3
    $region8: #{ffnn_lm_forward.1} parent=1 // loop_exit
      _
    %1129 = vsyncpa [#allocation7], 1
    %s1130 = scalar_lea.sflag [#allocation7], 1
    %1131 = vsyncpa %s1130, 1

</llo_original>
